<compile_context>
chip_gen: v5e
topology: v5e:2x2
jax: 0.10.0
libtpu: 0.0.40
codegen_flags: <defaults>
</compile_context>

<pallas_src>
import numpy as np

import jax
import jax.numpy as jnp
from jax.experimental import pallas as pl
from jax.experimental.pallas import tpu as pltpu


# ----------------------------------------------------------------------------
# Model configuration (mirrors the reference __init__ shapes)
# ----------------------------------------------------------------------------
IN_CH = 3
HIDDEN_SIZES = (8, 16, 32, 64)      # backbone.hidden_sizes
STRIDES = (4, 2, 2, 2)              # feature strides 4 / 8 / 16 / 32
CHANNELS = 32                       # head_hidden_size
NUM_CLASSES = 5
NUM_LEVELS = len(HIDDEN_SIZES)
BN_EPS = 1e-5


# ----------------------------------------------------------------------------
# Trace-time numpy constants (baked into the kernel, no XLA scatter/gather)
# ----------------------------------------------------------------------------
def _bilinear_matrix_np(in_size, out_size):
    """PyTorch align_corners=False bilinear interpolation matrix (out, in)."""
    scale = in_size / out_size
    dst = np.arange(out_size, dtype=np.float64)
    src = np.maximum((dst + 0.5) * scale - 0.5, 0.0)     # torch src-index rule
    x0 = np.clip(np.floor(src).astype(np.int64), 0, in_size - 1)
    x1 = np.minimum(x0 + 1, in_size - 1)
    lam = src - x0
    m = np.zeros((out_size, in_size), np.float64)
    rows = np.arange(out_size)
    np.add.at(m, (rows, x0), 1.0 - lam)
    np.add.at(m, (rows, x1), lam)
    return m.astype(np.float32)


def _resize_matrix_np(in_h, in_w, out_h, out_w):
    """Combined (out_h*out_w, in_h*in_w) bilinear resize matrix (Kronecker)."""
    ah = _bilinear_matrix_np(in_h, out_h)
    aw = _bilinear_matrix_np(in_w, out_w)
    return np.kron(ah, aw)


def _select_matrices_np(h_in, w_in):
    """Stride-2 space-to-depth column-selection matrices (already transposed).

    Shape (4, h_in*w_in, (h_in//2)*(w_in//2)); group g = di*2 + dj.  Right-
    multiplying a channels-first (c, h_in*w_in) feature by s[g] picks, for
    every stride-2 output position, the input column at offset (di, dj).
    """
    h_out, w_out = h_in // 2, w_in // 2
    s = np.zeros((4, h_in * w_in, h_out * w_out), np.float32)
    for di in range(2):
        for dj in range(2):
            g = di * 2 + dj
            for ho in range(h_out):
                for wo in range(w_out):
                    s[g, (2 * ho + di) * w_in + (2 * wo + dj),
                      ho * w_out + wo] = 1.0
    return s


# ----------------------------------------------------------------------------
# The single fused kernel: backbone + SegformerHead + x4 upsample, per batch.
# Everything is channels-first; all intermediates live in vregs/VMEM.
# ----------------------------------------------------------------------------
def _segformer_kernel(xT_ref,                                   # (1, K1, P)
                      w1T_ref, b1_ref,                          # stage 1
                      w2T_ref, s2T_ref, b2_ref,                 # stage 2
                      w3T_ref, s3T_ref, b3_ref,                 # stage 3
                      w4T_ref, s4T_ref, b4_ref,                 # stage 4
                      wf0T_ref, wf1T_ref, wf2T_ref, wf3T_ref,   # folded MLP+fusion+BNscale
                      fbias_ref,                                # (C, 1)
                      r1T_ref, r2T_ref, r3T_ref,                # (hw_i, P) resize (level 0 skipped)
                      segwT_ref, segb_ref,                      # (ncls, C), (ncls, 1)
                      upT_ref,                                  # (P, HW)
                      out_ref):                                 # (1, ncls, HW)
    def mm(a, b):
        return jnp.dot(a, b, preferred_element_type=jnp.float32)

    # ---------------- backbone: patch-embed stages (channels-first) ----------
    f0 = jnp.maximum(mm(w1T_ref[...], xT_ref[0]) + b1_ref[...], 0.0)   # (8, P)

    def stage(yT, wT_ref, sT_ref, b_ref):
        hw_in, hw_out = sT_ref.shape[1], sT_ref.shape[2]
        acc = None
        for g in range(4):
            if hw_in == 4 and hw_out == 1:
                # 2x2 -> 1x1 stage: group g is exactly input column g; use a
                # static lane slice of a regular dot instead of an N=1 MXU dot.
                pg = mm(wT_ref[g], yT)[:, g:g + 1]
            else:
                pg = mm(wT_ref[g], mm(yT, sT_ref[g]))
            acc = pg if acc is None else acc + pg
        return jnp.maximum(acc + b_ref[...], 0.0)

    f1 = stage(f0, w2T_ref, s2T_ref, b2_ref)                   # (16, P/4)
    f2 = stage(f1, w3T_ref, s3T_ref, b3_ref)                   # (32, P/16)
    f3 = stage(f2, w4T_ref, s4T_ref, b4_ref)                   # (64, P/64)

    # ---------------- SegformerHead (weights pre-folded at trace time) -------
    feats = (f0, f1, f2, f3)
    wf_refs = (wf0T_ref, wf1T_ref, wf2T_ref, wf3T_ref)
    r_refs = (None, r1T_ref, r2T_ref, r3T_ref)

    acc = None
    for i in range(NUM_LEVELS):
        f, r = feats[i], r_refs[i]
        if r is None:
            z = mm(wf_refs[i][...], f)                          # level 0: already /4 grid
        elif f.shape[1] == 1:
            # 1x1 level: broadcast on the VPU first -> no K=1 / N=1 MXU dots.
            z = mm(wf_refs[i][...], f * r[...])                 # (C, P)
        else:
            z = mm(mm(wf_refs[i][...], f), r[...])              # project then resize
        acc = z if acc is None else acc + z

    fused = jnp.maximum(acc + fbias_ref[...], 0.0)              # folded BN + ReLU, (C, P)
    # Dropout2d: identity at inference.
    logitsT = mm(segwT_ref[...], fused) + segb_ref[...]         # conv_seg, (ncls, P)
    # final x4 bilinear upsample; lane-dense (ncls, HW) store, already NCHW-flat.
    out_ref[0] = mm(logitsT, upT_ref[...]).astype(out_ref.dtype)


# ----------------------------------------------------------------------------
# Parameter construction (mirrors the reference __init__ shapes & inits)
# ----------------------------------------------------------------------------
def init_params(key):
    keys = jax.random.split(key, 12)
    ki = 0
    p = {}
    # synthetic backbone patch-embed weights: (s*s*c_in, c_out)
    bw, bb = [], []
    cin = IN_CH
    for s, cout in zip(STRIDES, HIDDEN_SIZES):
        bw.append(0.02 * jax.random.normal(keys[ki], (s * s * cin, cout), jnp.float32)); ki += 1
        bb.append(jnp.zeros((cout,), jnp.float32))
        cin = cout
    p['backbone_w'], p['backbone_b'] = bw, bb
    # SegformerHead MLPs: Linear(in_ch_i, channels), trunc_normal std=0.02, bias=0
    mw, mb = [], []
    for hs in HIDDEN_SIZES:
        mw.append(0.02 * jax.random.normal(keys[ki], (hs, CHANNELS), jnp.float32)); ki += 1
        mb.append(jnp.zeros((CHANNELS,), jnp.float32))
    p['mlp_w'], p['mlp_b'] = mw, mb
    # fusion_conv: 1x1 conv (no bias) + BN + ReLU, kaiming init; BN stats for fold
    fin = CHANNELS * NUM_LEVELS
    p['fusion_w'] = jax.random.normal(keys[ki], (fin, CHANNELS), jnp.float32) * jnp.sqrt(2.0 / fin); ki += 1
    p['bn_gamma'] = jnp.ones((CHANNELS,), jnp.float32)
    p['bn_beta'] = jnp.zeros((CHANNELS,), jnp.float32)
    p['bn_mean'] = jnp.zeros((CHANNELS,), jnp.float32)
    p['bn_var'] = jnp.ones((CHANNELS,), jnp.float32)
    # conv_seg: 1x1 conv with bias; kaiming init, bias=0
    p['seg_w'] = jax.random.normal(keys[ki], (CHANNELS, NUM_CLASSES), jnp.float32) * jnp.sqrt(2.0 / CHANNELS); ki += 1
    p['seg_b'] = jnp.zeros((NUM_CLASSES,), jnp.float32)
    return p


def _prepare_inference_params(params):
    """Trace-time folding & transposition into the kernel's channels-first layout."""
    C = CHANNELS
    prep = {}
    # backbone stage 1
    prep['w1T'] = params['backbone_w'][0].T.astype(jnp.float32)            # (c1, s0*s0*IN_CH)
    prep['b1'] = params['backbone_b'][0].reshape(-1, 1).astype(jnp.float32)
    # backbone stages 2..4: split (4*c_in, c_out) weight into per-offset blocks
    for l in range(1, NUM_LEVELS):
        cin = HIDDEN_SIZES[l - 1]
        w = params['backbone_w'][l]
        prep[f'w{l + 1}T'] = jnp.stack(
            [w[g * cin:(g + 1) * cin, :].T for g in range(4)]).astype(jnp.float32)  # (4, c_out, c_in)
        prep[f'b{l + 1}'] = params['backbone_b'][l].reshape(-1, 1).astype(jnp.float32)
    # head: fold MLP proj + fusion_conv slice + general BN fold per level
    bn_scale = params['bn_gamma'] / jnp.sqrt(params['bn_var'] + BN_EPS)
    fused_bias = params['bn_beta'] - params['bn_mean'] * bn_scale
    for i in range(NUM_LEVELS):
        fw_i = params['fusion_w'][i * C:(i + 1) * C, :]                    # (C, C)
        wf_i = (params['mlp_w'][i] @ fw_i) * bn_scale[None, :]             # (c_i, C)
        prep[f'wf{i}T'] = wf_i.T.astype(jnp.float32)                       # (C, c_i)
        # bilinear resize rows sum to 1 -> the MLP bias folds to a constant row
        fused_bias = fused_bias + (params['mlp_b'][i] @ fw_i) * bn_scale
    prep['fbias'] = fused_bias.reshape(-1, 1).astype(jnp.float32)          # (C, 1)
    prep['segwT'] = params['seg_w'].T.astype(jnp.float32)                  # (ncls, C)
    prep['segb'] = params['seg_b'].reshape(-1, 1).astype(jnp.float32)      # (ncls, 1)
    return prep


# ----------------------------------------------------------------------------
# Forward pass (inference): mirrors SegFormerBase.forward, one pallas_call
# ----------------------------------------------------------------------------
def segformer_forward(params, x_nchw):
    B, cin, H, W = x_nchw.shape
    s0 = STRIDES[0]
    H0, W0 = H // s0, W // s0                    # level-0 grid == head out_size
    Hf, Wf = 4 * H0, 4 * W0                      # scale_factor=4 final upsample
    P, HW = H0 * W0, Hf * Wf

    prep = _prepare_inference_params(params)

    # stage-1 patch extraction (the only XLA glue left), channels-first:
    # row = (di, dj, c) patch feature, column = (ho, wo) output position.
    xT = (x_nchw.reshape(B, cin, H0, s0, W0, s0)
                .transpose(0, 3, 5, 1, 2, 4)
                .reshape(B, s0 * s0 * cin, H0 * W0)).astype(jnp.float32)

    # space-to-depth selection constants for the stride-2 stages
    sel, (hs, ws) = [], (H0, W0)
    for _ in range(1, NUM_LEVELS):
        sel.append(jnp.asarray(_select_matrices_np(hs, ws)))
        hs, ws = hs // 2, ws // 2

    # per-level grids (level 0 == /4 out grid -> identity resize, skipped)
    grids, (hs, ws) = [], (H0, W0)
    for _ in range(NUM_LEVELS):
        grids.append((hs, ws))
        hs, ws = hs // 2, ws // 2
    rT = [jnp.asarray(_resize_matrix_np(h, w, H0, W0).T) for (h, w) in grids[1:]]
    upT = jnp.asarray(_resize_matrix_np(H0, W0, Hf, Wf).T)                 # (P, HW)

    operands = (xT,
                prep['w1T'], prep['b1'],
                prep['w2T'], sel[0], prep['b2'],
                prep['w3T'], sel[1], prep['b3'],
                prep['w4T'], sel[2], prep['b4'],
                prep['wf0T'], prep['wf1T'], prep['wf2T'], prep['wf3T'],
                prep['fbias'],
                rT[0], rT[1], rT[2],
                prep['segwT'], prep['segb'], upT)

    def const_spec(a):
        if a.ndim == 2:
            return pl.BlockSpec(a.shape, lambda b: (0, 0))
        return pl.BlockSpec(a.shape, lambda b: (0, 0, 0))

    in_specs = [pl.BlockSpec((1,) + xT.shape[1:], lambda b: (b, 0, 0))]
    in_specs += [const_spec(a) for a in operands[1:]]

    out = pl.pallas_call(
        _segformer_kernel,
        out_shape=jax.ShapeDtypeStruct((B, NUM_CLASSES, HW), jnp.float32),
        grid=(B,),
        in_specs=in_specs,
        out_specs=pl.BlockSpec((1, NUM_CLASSES, HW), lambda b: (b, 0, 0)),
        compiler_params=pltpu.CompilerParams(dimension_semantics=("parallel",)),
    )(*operands)

    # already channels-first & NCHW-flat: just a free reshape, no transpose.
    return out.reshape(B, NUM_CLASSES, Hf, Wf)


if __name__ == "__main__":
    key = jax.random.PRNGKey(0)
    pkey, xkey = jax.random.split(key)
    params = init_params(pkey)
    # spatial must be >= 32 so the stride-32 level is at least 1x1
    x = jax.random.normal(xkey, (2, IN_CH, 32, 32), jnp.float32)   # NCHW input

    fwd = jax.jit(lambda inp: segformer_forward(params, inp))
    out = jax.block_until_ready(fwd(x))

    assert out.shape == (2, NUM_CLASSES, 32, 32), out.shape
    assert out.dtype == jnp.float32
    assert bool(jnp.all(jnp.isfinite(out)))
    print("KERNEL_OK")
</pallas_src>

<mosaic_0001>
module attributes {stable_mosaic.version = 11 : i64} {
  func.func @_segformer_kernel(%arg0: i32, %arg1: memref<1x48x64xf32, #tpu.memory_space<vmem>>, %arg2: memref<8x48xf32, #tpu.memory_space<vmem>>, %arg3: memref<8x1xf32, #tpu.memory_space<vmem>>, %arg4: memref<4x16x8xf32, #tpu.memory_space<vmem>>, %arg5: memref<4x64x16xf32, #tpu.memory_space<vmem>>, %arg6: memref<16x1xf32, #tpu.memory_space<vmem>>, %arg7: memref<4x32x16xf32, #tpu.memory_space<vmem>>, %arg8: memref<4x16x4xf32, #tpu.memory_space<vmem>>, %arg9: memref<32x1xf32, #tpu.memory_space<vmem>>, %arg10: memref<4x64x32xf32, #tpu.memory_space<vmem>>, %arg11: memref<4x4x1xf32, #tpu.memory_space<vmem>>, %arg12: memref<64x1xf32, #tpu.memory_space<vmem>>, %arg13: memref<32x8xf32, #tpu.memory_space<vmem>>, %arg14: memref<32x16xf32, #tpu.memory_space<vmem>>, %arg15: memref<32x32xf32, #tpu.memory_space<vmem>>, %arg16: memref<32x64xf32, #tpu.memory_space<vmem>>, %arg17: memref<32x1xf32, #tpu.memory_space<vmem>>, %arg18: memref<16x64xf32, #tpu.memory_space<vmem>>, %arg19: memref<4x64xf32, #tpu.memory_space<vmem>>, %arg20: memref<1x64xf32, #tpu.memory_space<vmem>>, %arg21: memref<5x32xf32, #tpu.memory_space<vmem>>, %arg22: memref<5x1xf32, #tpu.memory_space<vmem>>, %arg23: memref<64x1024xf32, #tpu.memory_space<vmem>>, %arg24: memref<1x5x1024xf32, #tpu.memory_space<vmem>>) attributes {dimension_semantics = [#tpu.dimension_semantics<parallel>], iteration_bounds = array<i64: 2>, scalar_prefetch = 0 : i64, scratch_operands = 0 : i64, tpu.core_type = #tpu.core_type<tc>, window_params = [{transform_indices = @transform_0, window_bounds = array<i64: 1, 48, 64>}, {pipeline_mode = #tpu.pipeline_mode<synchronous>, transform_indices = @transform_1, window_bounds = array<i64: 8, 48>}, {pipeline_mode = #tpu.pipeline_mode<synchronous>, transform_indices = @transform_2, window_bounds = array<i64: 8, 1>}, {pipeline_mode = #tpu.pipeline_mode<synchronous>, transform_indices = @transform_3, window_bounds = array<i64: 4, 16, 8>}, {pipeline_mode = #tpu.pipeline_mode<synchronous>, transform_indices = @transform_4, window_bounds = array<i64: 4, 64, 16>}, {pipeline_mode = #tpu.pipeline_mode<synchronous>, transform_indices = @transform_5, window_bounds = array<i64: 16, 1>}, {pipeline_mode = #tpu.pipeline_mode<synchronous>, transform_indices = @transform_6, window_bounds = array<i64: 4, 32, 16>}, {pipeline_mode = #tpu.pipeline_mode<synchronous>, transform_indices = @transform_7, window_bounds = array<i64: 4, 16, 4>}, {pipeline_mode = #tpu.pipeline_mode<synchronous>, transform_indices = @transform_8, window_bounds = array<i64: 32, 1>}, {pipeline_mode = #tpu.pipeline_mode<synchronous>, transform_indices = @transform_9, window_bounds = array<i64: 4, 64, 32>}, {pipeline_mode = #tpu.pipeline_mode<synchronous>, transform_indices = @transform_10, window_bounds = array<i64: 4, 4, 1>}, {pipeline_mode = #tpu.pipeline_mode<synchronous>, transform_indices = @transform_11, window_bounds = array<i64: 64, 1>}, {pipeline_mode = #tpu.pipeline_mode<synchronous>, transform_indices = @transform_12, window_bounds = array<i64: 32, 8>}, {pipeline_mode = #tpu.pipeline_mode<synchronous>, transform_indices = @transform_13, window_bounds = array<i64: 32, 16>}, {pipeline_mode = #tpu.pipeline_mode<synchronous>, transform_indices = @transform_14, window_bounds = array<i64: 32, 32>}, {pipeline_mode = #tpu.pipeline_mode<synchronous>, transform_indices = @transform_15, window_bounds = array<i64: 32, 64>}, {pipeline_mode = #tpu.pipeline_mode<synchronous>, transform_indices = @transform_16, window_bounds = array<i64: 32, 1>}, {pipeline_mode = #tpu.pipeline_mode<synchronous>, transform_indices = @transform_17, window_bounds = array<i64: 16, 64>}, {pipeline_mode = #tpu.pipeline_mode<synchronous>, transform_indices = @transform_18, window_bounds = array<i64: 4, 64>}, {pipeline_mode = #tpu.pipeline_mode<synchronous>, transform_indices = @transform_19, window_bounds = array<i64: 1, 64>}, {pipeline_mode = #tpu.pipeline_mode<synchronous>, transform_indices = @transform_20, window_bounds = array<i64: 5, 32>}, {pipeline_mode = #tpu.pipeline_mode<synchronous>, transform_indices = @transform_21, window_bounds = array<i64: 5, 1>}, {pipeline_mode = #tpu.pipeline_mode<synchronous>, transform_indices = @transform_22, window_bounds = array<i64: 64, 1024>}, {transform_indices = @transform_23, window_bounds = array<i64: 1, 5, 1024>}]} {
    %c0 = arith.constant 0 : index
    %c0_0 = arith.constant 0 : index
    %0 = vector.load %arg2[%c0, %c0_0] : memref<8x48xf32, #tpu.memory_space<vmem>>, vector<8x48xf32>
    %c0_1 = arith.constant 0 : index
    %c0_2 = arith.constant 0 : index
    %c0_3 = arith.constant 0 : index
    %1 = vector.load %arg1[%c0_1, %c0_2, %c0_3] : memref<1x48x64xf32, #tpu.memory_space<vmem>>, vector<1x48x64xf32>
    %2 = vector.shape_cast %1 : vector<1x48x64xf32> to vector<48x64xf32>
    %cst = arith.constant dense<0.000000e+00> : vector<8x64xf32>
    %3 = tpu.matmul %0, %2, %cst {dimension_numbers = #tpu.dot_dimension_numbers<[1], [0], [0], [1], [0, 0, 1, 1], [], []>} : vector<8x48xf32>, vector<48x64xf32>, vector<8x64xf32> -> vector<8x64xf32>
    %c0_4 = arith.constant 0 : index
    %c0_5 = arith.constant 0 : index
    %4 = vector.load %arg3[%c0_4, %c0_5] : memref<8x1xf32, #tpu.memory_space<vmem>>, vector<8x1xf32>
    %5 = vector.broadcast %4 : vector<8x1xf32> to vector<8x64xf32>
    %6 = arith.addf %3, %5 : vector<8x64xf32>
    %cst_6 = arith.constant 0.000000e+00 : f32
    %7 = vector.broadcast %cst_6 : f32 to vector<8x64xf32>
    %8 = arith.maximumf %6, %7 : vector<8x64xf32>
    %c0_7 = arith.constant 0 : index
    %c0_8 = arith.constant 0 : index
    %c0_9 = arith.constant 0 : index
    %9 = vector.load %arg4[%c0_7, %c0_8, %c0_9] : memref<4x16x8xf32, #tpu.memory_space<vmem>>, vector<1x16x8xf32>
    %10 = vector.shape_cast %9 : vector<1x16x8xf32> to vector<16x8xf32>
    %c0_10 = arith.constant 0 : index
    %c0_11 = arith.constant 0 : index
    %c0_12 = arith.constant 0 : index
    %11 = vector.load %arg5[%c0_10, %c0_11, %c0_12] : memref<4x64x16xf32, #tpu.memory_space<vmem>>, vector<1x64x16xf32>
    %12 = vector.shape_cast %11 : vector<1x64x16xf32> to vector<64x16xf32>
    %cst_13 = arith.constant dense<0.000000e+00> : vector<8x16xf32>
    %13 = tpu.matmul %8, %12, %cst_13 {dimension_numbers = #tpu.dot_dimension_numbers<[1], [0], [0], [1], [0, 0, 1, 1], [], []>} : vector<8x64xf32>, vector<64x16xf32>, vector<8x16xf32> -> vector<8x16xf32>
    %cst_14 = arith.constant dense<0.000000e+00> : vector<16x16xf32>
    %14 = tpu.matmul %10, %13, %cst_14 {dimension_numbers = #tpu.dot_dimension_numbers<[1], [0], [0], [1], [0, 0, 1, 1], [], []>} : vector<16x8xf32>, vector<8x16xf32>, vector<16x16xf32> -> vector<16x16xf32>
    %c1 = arith.constant 1 : index
    %c0_15 = arith.constant 0 : index
    %c0_16 = arith.constant 0 : index
    %15 = vector.load %arg4[%c1, %c0_15, %c0_16] : memref<4x16x8xf32, #tpu.memory_space<vmem>>, vector<1x16x8xf32>
    %16 = vector.shape_cast %15 : vector<1x16x8xf32> to vector<16x8xf32>
    %c1_17 = arith.constant 1 : index
    %c0_18 = arith.constant 0 : index
    %c0_19 = arith.constant 0 : index
    %17 = vector.load %arg5[%c1_17, %c0_18, %c0_19] : memref<4x64x16xf32, #tpu.memory_space<vmem>>, vector<1x64x16xf32>
    %18 = vector.shape_cast %17 : vector<1x64x16xf32> to vector<64x16xf32>
    %cst_20 = arith.constant dense<0.000000e+00> : vector<8x16xf32>
    %19 = tpu.matmul %8, %18, %cst_20 {dimension_numbers = #tpu.dot_dimension_numbers<[1], [0], [0], [1], [0, 0, 1, 1], [], []>} : vector<8x64xf32>, vector<64x16xf32>, vector<8x16xf32> -> vector<8x16xf32>
    %cst_21 = arith.constant dense<0.000000e+00> : vector<16x16xf32>
    %20 = tpu.matmul %16, %19, %cst_21 {dimension_numbers = #tpu.dot_dimension_numbers<[1], [0], [0], [1], [0, 0, 1, 1], [], []>} : vector<16x8xf32>, vector<8x16xf32>, vector<16x16xf32> -> vector<16x16xf32>
    %21 = arith.addf %14, %20 : vector<16x16xf32>
    %c2 = arith.constant 2 : index
    %c0_22 = arith.constant 0 : index
    %c0_23 = arith.constant 0 : index
    %22 = vector.load %arg4[%c2, %c0_22, %c0_23] : memref<4x16x8xf32, #tpu.memory_space<vmem>>, vector<1x16x8xf32>
    %23 = vector.shape_cast %22 : vector<1x16x8xf32> to vector<16x8xf32>
    %c2_24 = arith.constant 2 : index
    %c0_25 = arith.constant 0 : index
    %c0_26 = arith.constant 0 : index
    %24 = vector.load %arg5[%c2_24, %c0_25, %c0_26] : memref<4x64x16xf32, #tpu.memory_space<vmem>>, vector<1x64x16xf32>
    %25 = vector.shape_cast %24 : vector<1x64x16xf32> to vector<64x16xf32>
    %cst_27 = arith.constant dense<0.000000e+00> : vector<8x16xf32>
    %26 = tpu.matmul %8, %25, %cst_27 {dimension_numbers = #tpu.dot_dimension_numbers<[1], [0], [0], [1], [0, 0, 1, 1], [], []>} : vector<8x64xf32>, vector<64x16xf32>, vector<8x16xf32> -> vector<8x16xf32>
    %cst_28 = arith.constant dense<0.000000e+00> : vector<16x16xf32>
    %27 = tpu.matmul %23, %26, %cst_28 {dimension_numbers = #tpu.dot_dimension_numbers<[1], [0], [0], [1], [0, 0, 1, 1], [], []>} : vector<16x8xf32>, vector<8x16xf32>, vector<16x16xf32> -> vector<16x16xf32>
    %28 = arith.addf %21, %27 : vector<16x16xf32>
    %c3 = arith.constant 3 : index
    %c0_29 = arith.constant 0 : index
    %c0_30 = arith.constant 0 : index
    %29 = vector.load %arg4[%c3, %c0_29, %c0_30] : memref<4x16x8xf32, #tpu.memory_space<vmem>>, vector<1x16x8xf32>
    %30 = vector.shape_cast %29 : vector<1x16x8xf32> to vector<16x8xf32>
    %c3_31 = arith.constant 3 : index
    %c0_32 = arith.constant 0 : index
    %c0_33 = arith.constant 0 : index
    %31 = vector.load %arg5[%c3_31, %c0_32, %c0_33] : memref<4x64x16xf32, #tpu.memory_space<vmem>>, vector<1x64x16xf32>
    %32 = vector.shape_cast %31 : vector<1x64x16xf32> to vector<64x16xf32>
    %cst_34 = arith.constant dense<0.000000e+00> : vector<8x16xf32>
    %33 = tpu.matmul %8, %32, %cst_34 {dimension_numbers = #tpu.dot_dimension_numbers<[1], [0], [0], [1], [0, 0, 1, 1], [], []>} : vector<8x64xf32>, vector<64x16xf32>, vector<8x16xf32> -> vector<8x16xf32>
    %cst_35 = arith.constant dense<0.000000e+00> : vector<16x16xf32>
    %34 = tpu.matmul %30, %33, %cst_35 {dimension_numbers = #tpu.dot_dimension_numbers<[1], [0], [0], [1], [0, 0, 1, 1], [], []>} : vector<16x8xf32>, vector<8x16xf32>, vector<16x16xf32> -> vector<16x16xf32>
    %35 = arith.addf %28, %34 : vector<16x16xf32>
    %c0_36 = arith.constant 0 : index
    %c0_37 = arith.constant 0 : index
    %36 = vector.load %arg6[%c0_36, %c0_37] : memref<16x1xf32, #tpu.memory_space<vmem>>, vector<16x1xf32>
    %37 = vector.broadcast %36 : vector<16x1xf32> to vector<16x16xf32>
    %38 = arith.addf %35, %37 : vector<16x16xf32>
    %cst_38 = arith.constant 0.000000e+00 : f32
    %39 = vector.broadcast %cst_38 : f32 to vector<16x16xf32>
    %40 = arith.maximumf %38, %39 : vector<16x16xf32>
    %c0_39 = arith.constant 0 : index
    %c0_40 = arith.constant 0 : index
    %c0_41 = arith.constant 0 : index
    %41 = vector.load %arg7[%c0_39, %c0_40, %c0_41] : memref<4x32x16xf32, #tpu.memory_space<vmem>>, vector<1x32x16xf32>
    %42 = vector.shape_cast %41 : vector<1x32x16xf32> to vector<32x16xf32>
    %c0_42 = arith.constant 0 : index
    %c0_43 = arith.constant 0 : index
    %c0_44 = arith.constant 0 : index
    %43 = vector.load %arg8[%c0_42, %c0_43, %c0_44] : memref<4x16x4xf32, #tpu.memory_space<vmem>>, vector<1x16x4xf32>
    %44 = vector.shape_cast %43 : vector<1x16x4xf32> to vector<16x4xf32>
    %cst_45 = arith.constant dense<0.000000e+00> : vector<16x4xf32>
    %45 = tpu.matmul %40, %44, %cst_45 {dimension_numbers = #tpu.dot_dimension_numbers<[1], [0], [0], [1], [0, 0, 1, 1], [], []>} : vector<16x16xf32>, vector<16x4xf32>, vector<16x4xf32> -> vector<16x4xf32>
    %cst_46 = arith.constant dense<0.000000e+00> : vector<32x4xf32>
    %46 = tpu.matmul %42, %45, %cst_46 {dimension_numbers = #tpu.dot_dimension_numbers<[1], [0], [0], [1], [0, 0, 1, 1], [], []>} : vector<32x16xf32>, vector<16x4xf32>, vector<32x4xf32> -> vector<32x4xf32>
    %c1_47 = arith.constant 1 : index
    %c0_48 = arith.constant 0 : index
    %c0_49 = arith.constant 0 : index
    %47 = vector.load %arg7[%c1_47, %c0_48, %c0_49] : memref<4x32x16xf32, #tpu.memory_space<vmem>>, vector<1x32x16xf32>
    %48 = vector.shape_cast %47 : vector<1x32x16xf32> to vector<32x16xf32>
    %c1_50 = arith.constant 1 : index
    %c0_51 = arith.constant 0 : index
    %c0_52 = arith.constant 0 : index
    %49 = vector.load %arg8[%c1_50, %c0_51, %c0_52] : memref<4x16x4xf32, #tpu.memory_space<vmem>>, vector<1x16x4xf32>
    %50 = vector.shape_cast %49 : vector<1x16x4xf32> to vector<16x4xf32>
    %cst_53 = arith.constant dense<0.000000e+00> : vector<16x4xf32>
    %51 = tpu.matmul %40, %50, %cst_53 {dimension_numbers = #tpu.dot_dimension_numbers<[1], [0], [0], [1], [0, 0, 1, 1], [], []>} : vector<16x16xf32>, vector<16x4xf32>, vector<16x4xf32> -> vector<16x4xf32>
    %cst_54 = arith.constant dense<0.000000e+00> : vector<32x4xf32>
    %52 = tpu.matmul %48, %51, %cst_54 {dimension_numbers = #tpu.dot_dimension_numbers<[1], [0], [0], [1], [0, 0, 1, 1], [], []>} : vector<32x16xf32>, vector<16x4xf32>, vector<32x4xf32> -> vector<32x4xf32>
    %53 = arith.addf %46, %52 : vector<32x4xf32>
    %c2_55 = arith.constant 2 : index
    %c0_56 = arith.constant 0 : index
    %c0_57 = arith.constant 0 : index
    %54 = vector.load %arg7[%c2_55, %c0_56, %c0_57] : memref<4x32x16xf32, #tpu.memory_space<vmem>>, vector<1x32x16xf32>
    %55 = vector.shape_cast %54 : vector<1x32x16xf32> to vector<32x16xf32>
    %c2_58 = arith.constant 2 : index
    %c0_59 = arith.constant 0 : index
    %c0_60 = arith.constant 0 : index
    %56 = vector.load %arg8[%c2_58, %c0_59, %c0_60] : memref<4x16x4xf32, #tpu.memory_space<vmem>>, vector<1x16x4xf32>
    %57 = vector.shape_cast %56 : vector<1x16x4xf32> to vector<16x4xf32>
    %cst_61 = arith.constant dense<0.000000e+00> : vector<16x4xf32>
    %58 = tpu.matmul %40, %57, %cst_61 {dimension_numbers = #tpu.dot_dimension_numbers<[1], [0], [0], [1], [0, 0, 1, 1], [], []>} : vector<16x16xf32>, vector<16x4xf32>, vector<16x4xf32> -> vector<16x4xf32>
    %cst_62 = arith.constant dense<0.000000e+00> : vector<32x4xf32>
    %59 = tpu.matmul %55, %58, %cst_62 {dimension_numbers = #tpu.dot_dimension_numbers<[1], [0], [0], [1], [0, 0, 1, 1], [], []>} : vector<32x16xf32>, vector<16x4xf32>, vector<32x4xf32> -> vector<32x4xf32>
    %60 = arith.addf %53, %59 : vector<32x4xf32>
    %c3_63 = arith.constant 3 : index
    %c0_64 = arith.constant 0 : index
    %c0_65 = arith.constant 0 : index
    %61 = vector.load %arg7[%c3_63, %c0_64, %c0_65] : memref<4x32x16xf32, #tpu.memory_space<vmem>>, vector<1x32x16xf32>
    %62 = vector.shape_cast %61 : vector<1x32x16xf32> to vector<32x16xf32>
    %c3_66 = arith.constant 3 : index
    %c0_67 = arith.constant 0 : index
    %c0_68 = arith.constant 0 : index
    %63 = vector.load %arg8[%c3_66, %c0_67, %c0_68] : memref<4x16x4xf32, #tpu.memory_space<vmem>>, vector<1x16x4xf32>
    %64 = vector.shape_cast %63 : vector<1x16x4xf32> to vector<16x4xf32>
    %cst_69 = arith.constant dense<0.000000e+00> : vector<16x4xf32>
    %65 = tpu.matmul %40, %64, %cst_69 {dimension_numbers = #tpu.dot_dimension_numbers<[1], [0], [0], [1], [0, 0, 1, 1], [], []>} : vector<16x16xf32>, vector<16x4xf32>, vector<16x4xf32> -> vector<16x4xf32>
    %cst_70 = arith.constant dense<0.000000e+00> : vector<32x4xf32>
    %66 = tpu.matmul %62, %65, %cst_70 {dimension_numbers = #tpu.dot_dimension_numbers<[1], [0], [0], [1], [0, 0, 1, 1], [], []>} : vector<32x16xf32>, vector<16x4xf32>, vector<32x4xf32> -> vector<32x4xf32>
    %67 = arith.addf %60, %66 : vector<32x4xf32>
    %c0_71 = arith.constant 0 : index
    %c0_72 = arith.constant 0 : index
    %68 = vector.load %arg9[%c0_71, %c0_72] : memref<32x1xf32, #tpu.memory_space<vmem>>, vector<32x1xf32>
    %69 = vector.broadcast %68 : vector<32x1xf32> to vector<32x4xf32>
    %70 = arith.addf %67, %69 : vector<32x4xf32>
    %cst_73 = arith.constant 0.000000e+00 : f32
    %71 = vector.broadcast %cst_73 : f32 to vector<32x4xf32>
    %72 = arith.maximumf %70, %71 : vector<32x4xf32>
    %c0_74 = arith.constant 0 : index
    %c0_75 = arith.constant 0 : index
    %c0_76 = arith.constant 0 : index
    %73 = vector.load %arg10[%c0_74, %c0_75, %c0_76] : memref<4x64x32xf32, #tpu.memory_space<vmem>>, vector<1x64x32xf32>
    %74 = vector.shape_cast %73 : vector<1x64x32xf32> to vector<64x32xf32>
    %cst_77 = arith.constant dense<0.000000e+00> : vector<64x4xf32>
    %75 = tpu.matmul %74, %72, %cst_77 {dimension_numbers = #tpu.dot_dimension_numbers<[1], [0], [0], [1], [0, 0, 1, 1], [], []>} : vector<64x32xf32>, vector<32x4xf32>, vector<64x4xf32> -> vector<64x4xf32>
    %76 = vector.extract_strided_slice %75 {offsets = [0, 0], sizes = [64, 1], strides = [1, 1]} : vector<64x4xf32> to vector<64x1xf32>
    %c1_78 = arith.constant 1 : index
    %c0_79 = arith.constant 0 : index
    %c0_80 = arith.constant 0 : index
    %77 = vector.load %arg10[%c1_78, %c0_79, %c0_80] : memref<4x64x32xf32, #tpu.memory_space<vmem>>, vector<1x64x32xf32>
    %78 = vector.shape_cast %77 : vector<1x64x32xf32> to vector<64x32xf32>
    %cst_81 = arith.constant dense<0.000000e+00> : vector<64x4xf32>
    %79 = tpu.matmul %78, %72, %cst_81 {dimension_numbers = #tpu.dot_dimension_numbers<[1], [0], [0], [1], [0, 0, 1, 1], [], []>} : vector<64x32xf32>, vector<32x4xf32>, vector<64x4xf32> -> vector<64x4xf32>
    %80 = vector.extract_strided_slice %79 {offsets = [0, 1], sizes = [64, 1], strides = [1, 1]} : vector<64x4xf32> to vector<64x1xf32>
    %81 = arith.addf %76, %80 : vector<64x1xf32>
    %c2_82 = arith.constant 2 : index
    %c0_83 = arith.constant 0 : index
    %c0_84 = arith.constant 0 : index
    %82 = vector.load %arg10[%c2_82, %c0_83, %c0_84] : memref<4x64x32xf32, #tpu.memory_space<vmem>>, vector<1x64x32xf32>
    %83 = vector.shape_cast %82 : vector<1x64x32xf32> to vector<64x32xf32>
    %cst_85 = arith.constant dense<0.000000e+00> : vector<64x4xf32>
    %84 = tpu.matmul %83, %72, %cst_85 {dimension_numbers = #tpu.dot_dimension_numbers<[1], [0], [0], [1], [0, 0, 1, 1], [], []>} : vector<64x32xf32>, vector<32x4xf32>, vector<64x4xf32> -> vector<64x4xf32>
    %85 = vector.extract_strided_slice %84 {offsets = [0, 2], sizes = [64, 1], strides = [1, 1]} : vector<64x4xf32> to vector<64x1xf32>
    %86 = arith.addf %81, %85 : vector<64x1xf32>
    %c3_86 = arith.constant 3 : index
    %c0_87 = arith.constant 0 : index
    %c0_88 = arith.constant 0 : index
    %87 = vector.load %arg10[%c3_86, %c0_87, %c0_88] : memref<4x64x32xf32, #tpu.memory_space<vmem>>, vector<1x64x32xf32>
    %88 = vector.shape_cast %87 : vector<1x64x32xf32> to vector<64x32xf32>
    %cst_89 = arith.constant dense<0.000000e+00> : vector<64x4xf32>
    %89 = tpu.matmul %88, %72, %cst_89 {dimension_numbers = #tpu.dot_dimension_numbers<[1], [0], [0], [1], [0, 0, 1, 1], [], []>} : vector<64x32xf32>, vector<32x4xf32>, vector<64x4xf32> -> vector<64x4xf32>
    %90 = vector.extract_strided_slice %89 {offsets = [0, 3], sizes = [64, 1], strides = [1, 1]} : vector<64x4xf32> to vector<64x1xf32>
    %91 = arith.addf %86, %90 : vector<64x1xf32>
    %c0_90 = arith.constant 0 : index
    %c0_91 = arith.constant 0 : index
    %92 = vector.load %arg12[%c0_90, %c0_91] : memref<64x1xf32, #tpu.memory_space<vmem>>, vector<64x1xf32>
    %93 = arith.addf %91, %92 : vector<64x1xf32>
    %cst_92 = arith.constant 0.000000e+00 : f32
    %94 = vector.broadcast %cst_92 : f32 to vector<64x1xf32>
    %95 = arith.maximumf %93, %94 : vector<64x1xf32>
    %c0_93 = arith.constant 0 : index
    %c0_94 = arith.constant 0 : index
    %96 = vector.load %arg13[%c0_93, %c0_94] : memref<32x8xf32, #tpu.memory_space<vmem>>, vector<32x8xf32>
    %cst_95 = arith.constant dense<0.000000e+00> : vector<32x64xf32>
    %97 = tpu.matmul %96, %8, %cst_95 {dimension_numbers = #tpu.dot_dimension_numbers<[1], [0], [0], [1], [0, 0, 1, 1], [], []>} : vector<32x8xf32>, vector<8x64xf32>, vector<32x64xf32> -> vector<32x64xf32>
    %c0_96 = arith.constant 0 : index
    %c0_97 = arith.constant 0 : index
    %98 = vector.load %arg14[%c0_96, %c0_97] : memref<32x16xf32, #tpu.memory_space<vmem>>, vector<32x16xf32>
    %cst_98 = arith.constant dense<0.000000e+00> : vector<32x16xf32>
    %99 = tpu.matmul %98, %40, %cst_98 {dimension_numbers = #tpu.dot_dimension_numbers<[1], [0], [0], [1], [0, 0, 1, 1], [], []>} : vector<32x16xf32>, vector<16x16xf32>, vector<32x16xf32> -> vector<32x16xf32>
    %c0_99 = arith.constant 0 : index
    %c0_100 = arith.constant 0 : index
    %100 = vector.load %arg18[%c0_99, %c0_100] : memref<16x64xf32, #tpu.memory_space<vmem>>, vector<16x64xf32>
    %cst_101 = arith.constant dense<0.000000e+00> : vector<32x64xf32>
    %101 = tpu.matmul %99, %100, %cst_101 {dimension_numbers = #tpu.dot_dimension_numbers<[1], [0], [0], [1], [0, 0, 1, 1], [], []>} : vector<32x16xf32>, vector<16x64xf32>, vector<32x64xf32> -> vector<32x64xf32>
    %102 = arith.addf %97, %101 : vector<32x64xf32>
    %c0_102 = arith.constant 0 : index
    %c0_103 = arith.constant 0 : index
    %103 = vector.load %arg15[%c0_102, %c0_103] : memref<32x32xf32, #tpu.memory_space<vmem>>, vector<32x32xf32>
    %cst_104 = arith.constant dense<0.000000e+00> : vector<32x4xf32>
    %104 = tpu.matmul %103, %72, %cst_104 {dimension_numbers = #tpu.dot_dimension_numbers<[1], [0], [0], [1], [0, 0, 1, 1], [], []>} : vector<32x32xf32>, vector<32x4xf32>, vector<32x4xf32> -> vector<32x4xf32>
    %c0_105 = arith.constant 0 : index
    %c0_106 = arith.constant 0 : index
    %105 = vector.load %arg19[%c0_105, %c0_106] : memref<4x64xf32, #tpu.memory_space<vmem>>, vector<4x64xf32>
    %cst_107 = arith.constant dense<0.000000e+00> : vector<32x64xf32>
    %106 = tpu.matmul %104, %105, %cst_107 {dimension_numbers = #tpu.dot_dimension_numbers<[1], [0], [0], [1], [0, 0, 1, 1], [], []>} : vector<32x4xf32>, vector<4x64xf32>, vector<32x64xf32> -> vector<32x64xf32>
    %107 = arith.addf %102, %106 : vector<32x64xf32>
    %c0_108 = arith.constant 0 : index
    %c0_109 = arith.constant 0 : index
    %108 = vector.load %arg16[%c0_108, %c0_109] : memref<32x64xf32, #tpu.memory_space<vmem>>, vector<32x64xf32>
    %c0_110 = arith.constant 0 : index
    %c0_111 = arith.constant 0 : index
    %109 = vector.load %arg20[%c0_110, %c0_111] : memref<1x64xf32, #tpu.memory_space<vmem>>, vector<1x64xf32>
    %110 = vector.broadcast %95 : vector<64x1xf32> to vector<64x64xf32>
    %111 = vector.broadcast %109 : vector<1x64xf32> to vector<64x64xf32>
    %112 = arith.mulf %110, %111 : vector<64x64xf32>
    %cst_112 = arith.constant dense<0.000000e+00> : vector<32x64xf32>
    %113 = tpu.matmul %108, %112, %cst_112 {dimension_numbers = #tpu.dot_dimension_numbers<[1], [0], [0], [1], [0, 0, 1, 1], [], []>} : vector<32x64xf32>, vector<64x64xf32>, vector<32x64xf32> -> vector<32x64xf32>
    %114 = arith.addf %107, %113 : vector<32x64xf32>
    %c0_113 = arith.constant 0 : index
    %c0_114 = arith.constant 0 : index
    %115 = vector.load %arg17[%c0_113, %c0_114] : memref<32x1xf32, #tpu.memory_space<vmem>>, vector<32x1xf32>
    %116 = vector.broadcast %115 : vector<32x1xf32> to vector<32x64xf32>
    %117 = arith.addf %114, %116 : vector<32x64xf32>
    %cst_115 = arith.constant 0.000000e+00 : f32
    %118 = vector.broadcast %cst_115 : f32 to vector<32x64xf32>
    %119 = arith.maximumf %117, %118 : vector<32x64xf32>
    %c0_116 = arith.constant 0 : index
    %c0_117 = arith.constant 0 : index
    %120 = vector.load %arg21[%c0_116, %c0_117] : memref<5x32xf32, #tpu.memory_space<vmem>>, vector<5x32xf32>
    %cst_118 = arith.constant dense<0.000000e+00> : vector<5x64xf32>
    %121 = tpu.matmul %120, %119, %cst_118 {dimension_numbers = #tpu.dot_dimension_numbers<[1], [0], [0], [1], [0, 0, 1, 1], [], []>} : vector<5x32xf32>, vector<32x64xf32>, vector<5x64xf32> -> vector<5x64xf32>
    %c0_119 = arith.constant 0 : index
    %c0_120 = arith.constant 0 : index
    %122 = vector.load %arg22[%c0_119, %c0_120] : memref<5x1xf32, #tpu.memory_space<vmem>>, vector<5x1xf32>
    %123 = vector.broadcast %122 : vector<5x1xf32> to vector<5x64xf32>
    %124 = arith.addf %121, %123 : vector<5x64xf32>
    %c0_121 = arith.constant 0 : index
    %c0_122 = arith.constant 0 : index
    %125 = vector.load %arg23[%c0_121, %c0_122] : memref<64x1024xf32, #tpu.memory_space<vmem>>, vector<64x1024xf32>
    %cst_123 = arith.constant dense<0.000000e+00> : vector<5x1024xf32>
    %126 = tpu.matmul %124, %125, %cst_123 {dimension_numbers = #tpu.dot_dimension_numbers<[1], [0], [0], [1], [0, 0, 1, 1], [], []>} : vector<5x64xf32>, vector<64x1024xf32>, vector<5x1024xf32> -> vector<5x1024xf32>
    %c0_124 = arith.constant 0 : index
    %c0_125 = arith.constant 0 : index
    %c0_126 = arith.constant 0 : index
    %127 = vector.load %arg24[%c0_124, %c0_125, %c0_126] : memref<1x5x1024xf32, #tpu.memory_space<vmem>>, vector<1x5x1024xf32>
    %128 = vector.shape_cast %127 : vector<1x5x1024xf32> to vector<5x1024xf32>
    %129 = vector.shape_cast %126 : vector<5x1024xf32> to vector<1x5x1024xf32>
    tpu.vector_store %arg24[%c0_124, %c0_125, %c0_126], %129 {strides = array<i32>} : memref<1x5x1024xf32, #tpu.memory_space<vmem>>, vector<1x5x1024xf32>,
    return
  }
  func.func @transform_0(%arg0: i32) -> (i32, i32, i32) {
    %c0_i32 = arith.constant 0 : i32
    %c0_i32_0 = arith.constant 0 : i32
    %c0_i32_1 = arith.constant 0 : i32
    return %arg0, %c0_i32, %c0_i32_0 : i32, i32, i32
  }
  func.func @transform_1(%arg0: i32) -> (i32, i32) {
    %c0_i32 = arith.constant 0 : i32
    %c0_i32_0 = arith.constant 0 : i32
    %c0_i32_1 = arith.constant 0 : i32
    return %c0_i32, %c0_i32_0 : i32, i32
  }
  func.func @transform_2(%arg0: i32) -> (i32, i32) {
    %c0_i32 = arith.constant 0 : i32
    %c0_i32_0 = arith.constant 0 : i32
    %c0_i32_1 = arith.constant 0 : i32
    return %c0_i32, %c0_i32_0 : i32, i32
  }
  func.func @transform_3(%arg0: i32) -> (i32, i32, i32) {
    %c0_i32 = arith.constant 0 : i32
    %c0_i32_0 = arith.constant 0 : i32
    %c0_i32_1 = arith.constant 0 : i32
    %c0_i32_2 = arith.constant 0 : i32
    return %c0_i32, %c0_i32_0, %c0_i32_1 : i32, i32, i32
  }
  func.func @transform_4(%arg0: i32) -> (i32, i32, i32) {
    %c0_i32 = arith.constant 0 : i32
    %c0_i32_0 = arith.constant 0 : i32
    %c0_i32_1 = arith.constant 0 : i32
    %c0_i32_2 = arith.constant 0 : i32
    return %c0_i32, %c0_i32_0, %c0_i32_1 : i32, i32, i32
  }
  func.func @transform_5(%arg0: i32) -> (i32, i32) {
    %c0_i32 = arith.constant 0 : i32
    %c0_i32_0 = arith.constant 0 : i32
    %c0_i32_1 = arith.constant 0 : i32
    return %c0_i32, %c0_i32_0 : i32, i32
  }
  func.func @transform_6(%arg0: i32) -> (i32, i32, i32) {
    %c0_i32 = arith.constant 0 : i32
    %c0_i32_0 = arith.constant 0 : i32
    %c0_i32_1 = arith.constant 0 : i32
    %c0_i32_2 = arith.constant 0 : i32
    return %c0_i32, %c0_i32_0, %c0_i32_1 : i32, i32, i32
  }
  func.func @transform_7(%arg0: i32) -> (i32, i32, i32) {
    %c0_i32 = arith.constant 0 : i32
    %c0_i32_0 = arith.constant 0 : i32
    %c0_i32_1 = arith.constant 0 : i32
    %c0_i32_2 = arith.constant 0 : i32
    return %c0_i32, %c0_i32_0, %c0_i32_1 : i32, i32, i32
  }
  func.func @transform_8(%arg0: i32) -> (i32, i32) {
    %c0_i32 = arith.constant 0 : i32
    %c0_i32_0 = arith.constant 0 : i32
    %c0_i32_1 = arith.constant 0 : i32
    return %c0_i32, %c0_i32_0 : i32, i32
  }
  func.func @transform_9(%arg0: i32) -> (i32, i32, i32) {
    %c0_i32 = arith.constant 0 : i32
    %c0_i32_0 = arith.constant 0 : i32
    %c0_i32_1 = arith.constant 0 : i32
    %c0_i32_2 = arith.constant 0 : i32
    return %c0_i32, %c0_i32_0, %c0_i32_1 : i32, i32, i32
  }
  func.func @transform_10(%arg0: i32) -> (i32, i32, i32) {
    %c0_i32 = arith.constant 0 : i32
    %c0_i32_0 = arith.constant 0 : i32
    %c0_i32_1 = arith.constant 0 : i32
    %c0_i32_2 = arith.constant 0 : i32
    return %c0_i32, %c0_i32_0, %c0_i32_1 : i32, i32, i32
  }
  func.func @transform_11(%arg0: i32) -> (i32, i32) {
    %c0_i32 = arith.constant 0 : i32
    %c0_i32_0 = arith.constant 0 : i32
    %c0_i32_1 = arith.constant 0 : i32
    return %c0_i32, %c0_i32_0 : i32, i32
  }
  func.func @transform_12(%arg0: i32) -> (i32, i32) {
    %c0_i32 = arith.constant 0 : i32
    %c0_i32_0 = arith.constant 0 : i32
    %c0_i32_1 = arith.constant 0 : i32
    return %c0_i32, %c0_i32_0 : i32, i32
  }
  func.func @transform_13(%arg0: i32) -> (i32, i32) {
    %c0_i32 = arith.constant 0 : i32
    %c0_i32_0 = arith.constant 0 : i32
    %c0_i32_1 = arith.constant 0 : i32
    return %c0_i32, %c0_i32_0 : i32, i32
  }
  func.func @transform_14(%arg0: i32) -> (i32, i32) {
    %c0_i32 = arith.constant 0 : i32
    %c0_i32_0 = arith.constant 0 : i32
    %c0_i32_1 = arith.constant 0 : i32
    return %c0_i32, %c0_i32_0 : i32, i32
  }
  func.func @transform_15(%arg0: i32) -> (i32, i32) {
    %c0_i32 = arith.constant 0 : i32
    %c0_i32_0 = arith.constant 0 : i32
    %c0_i32_1 = arith.constant 0 : i32
    return %c0_i32, %c0_i32_0 : i32, i32
  }
  func.func @transform_16(%arg0: i32) -> (i32, i32) {
    %c0_i32 = arith.constant 0 : i32
    %c0_i32_0 = arith.constant 0 : i32
    %c0_i32_1 = arith.constant 0 : i32
    return %c0_i32, %c0_i32_0 : i32, i32
  }
  func.func @transform_17(%arg0: i32) -> (i32, i32) {
    %c0_i32 = arith.constant 0 : i32
    %c0_i32_0 = arith.constant 0 : i32
    %c0_i32_1 = arith.constant 0 : i32
    return %c0_i32, %c0_i32_0 : i32, i32
  }
  func.func @transform_18(%arg0: i32) -> (i32, i32) {
    %c0_i32 = arith.constant 0 : i32
    %c0_i32_0 = arith.constant 0 : i32
    %c0_i32_1 = arith.constant 0 : i32
    return %c0_i32, %c0_i32_0 : i32, i32
  }
  func.func @transform_19(%arg0: i32) -> (i32, i32) {
    %c0_i32 = arith.constant 0 : i32
    %c0_i32_0 = arith.constant 0 : i32
    %c0_i32_1 = arith.constant 0 : i32
    return %c0_i32, %c0_i32_0 : i32, i32
  }
  func.func @transform_20(%arg0: i32) -> (i32, i32) {
    %c0_i32 = arith.constant 0 : i32
    %c0_i32_0 = arith.constant 0 : i32
    %c0_i32_1 = arith.constant 0 : i32
    return %c0_i32, %c0_i32_0 : i32, i32
  }
  func.func @transform_21(%arg0: i32) -> (i32, i32) {
    %c0_i32 = arith.constant 0 : i32
    %c0_i32_0 = arith.constant 0 : i32
    %c0_i32_1 = arith.constant 0 : i32
    return %c0_i32, %c0_i32_0 : i32, i32
  }
  func.func @transform_22(%arg0: i32) -> (i32, i32) {
    %c0_i32 = arith.constant 0 : i32
    %c0_i32_0 = arith.constant 0 : i32
    %c0_i32_1 = arith.constant 0 : i32
    return %c0_i32, %c0_i32_0 : i32, i32
  }
  func.func @transform_23(%arg0: i32) -> (i32, i32, i32) {
    %c0_i32 = arith.constant 0 : i32
    %c0_i32_0 = arith.constant 0 : i32
    %c0_i32_1 = arith.constant 0 : i32
    return %arg0, %c0_i32, %c0_i32_0 : i32, i32, i32
  }
}

</mosaic_0001>

<llo_original>
// kernel: _lambda_.1
$region0: #{_lambda_.1}
  #allocation0 [shape = 'u32[]', space=smem, size = 0x4, offset = 0x4, fixed_abs, tag = 'smem constant byte address 0x4 - core index']
  #allocation1 [shape = 'u32[72,128]{1,0:T(1,128)}', space=vmem, size = 0x9000, scoped, tag = 'internal scratch']
  %s0 = inlined_call_operand.vmem [shape: f32[2,48,64], index: 0, kind: input, shape index: {}]
  %s1 = inlined_call_operand.vmem [shape: f32[8,48], index: 1, kind: input, shape index: {}]
  %s2 = inlined_call_operand.vmem [shape: f32[8,1], index: 2, kind: input, shape index: {}]
  %s3 = inlined_call_operand.vmem [shape: f32[4,16,8], index: 3, kind: input, shape index: {}]
  %s4 = inlined_call_operand.vmem [shape: f32[4,64,16], index: 4, kind: input, shape index: {}]
  %s5 = inlined_call_operand.vmem [shape: f32[16,1], index: 5, kind: input, shape index: {}]
  %s6 = inlined_call_operand.vmem [shape: f32[4,32,16], index: 6, kind: input, shape index: {}]
  %s7 = inlined_call_operand.vmem [shape: f32[4,16,4], index: 7, kind: input, shape index: {}]
  %s8 = inlined_call_operand.vmem [shape: f32[32,1], index: 8, kind: input, shape index: {}, may-alias: {8,16}]
  %s9 = inlined_call_operand.vmem [shape: f32[4,64,32], index: 9, kind: input, shape index: {}]
  %s10 = inlined_call_operand.vmem [shape: f32[4,4,1], index: 10, kind: input, shape index: {}]
  %s11 = inlined_call_operand.vmem [shape: f32[64,1], index: 11, kind: input, shape index: {}]
  %s12 = inlined_call_operand.vmem [shape: f32[32,8], index: 12, kind: input, shape index: {}]
  %s13 = inlined_call_operand.vmem [shape: f32[32,16], index: 13, kind: input, shape index: {}]
  %s14 = inlined_call_operand.vmem [shape: f32[32,32], index: 14, kind: input, shape index: {}]
  %s15 = inlined_call_operand.vmem [shape: f32[32,64], index: 15, kind: input, shape index: {}]
  %s16 = inlined_call_operand.vmem [shape: f32[32,1], index: 16, kind: input, shape index: {}, may-alias: {8,16}]
  %s17 = inlined_call_operand.vmem [shape: f32[16,64], index: 17, kind: input, shape index: {}]
  %s18 = inlined_call_operand.vmem [shape: f32[4,64], index: 18, kind: input, shape index: {}]
  %s19 = inlined_call_operand.vmem [shape: f32[1,64], index: 19, kind: input, shape index: {}]
  %s20 = inlined_call_operand.vmem [shape: f32[5,32], index: 20, kind: input, shape index: {}]
  %s21 = inlined_call_operand.vmem [shape: f32[5,1], index: 21, kind: input, shape index: {}]
  %s22 = inlined_call_operand.vmem [shape: f32[64,1024], index: 22, kind: input, shape index: {}]
  %s23 = inlined_call_operand.vmem [shape: f32[2,5,1024], index: 23, kind: output, shape index: {}]
  %s24 = sld [smem:[#allocation0]]
  $region125: #{_lambda_.1} parent=0
    _
  %s26 = ssub.s32 1, %s24
  %s27 = scalar_select 0, %s26, %s24
  loop: start=0, step=1, limit=4
  $region2: #{_lambda_.1} parent=0 // loop_pre_header
    _
  $region3: #{_lambda_.1} parent=0 // loop_header
    %s29 = sphi 0, %s33
    %p30 = scmp.ge.s32.totalorder %s29, 4
    %s39 = sphi 0, %s41
    %s42 = sphi 0, %s39
    %s43 = sphi 0, %s42
    %s59 = sphi 0, %s43
    %s63 = sphi 0, %s63
    %s65 = sphi 0, %s63
    %s66 = sphi 0, %s65
    %s80 = sphi 0, %s66
    %s84 = sphi 0, %s84
    %s86 = sphi 0, %s84
    %s87 = sphi 0, %s86
    %s101 = sphi 0, %s87
    %s105 = sphi 0, %s105
    %s107 = sphi 0, %s105
    %s108 = sphi 0, %s107
    %s122 = sphi 0, %s108
    %s126 = sphi 0, %s126
    %s128 = sphi 0, %s126
    %s129 = sphi 0, %s128
    %s143 = sphi 0, %s129
    %s147 = sphi 0, %s147
    %s149 = sphi 0, %s147
    %s150 = sphi 0, %s149
    %s164 = sphi 0, %s150
    %s168 = sphi 0, %s168
    %s170 = sphi 0, %s168
    %s171 = sphi 0, %s170
    %s185 = sphi 0, %s171
    %s189 = sphi 0, %s189
    %s191 = sphi 0, %s189
    %s192 = sphi 0, %s191
    %s206 = sphi 0, %s192
    %s210 = sphi 0, %s210
    %s212 = sphi 0, %s210
    %s213 = sphi 0, %s212
    %s227 = sphi 0, %s213
    %s231 = sphi 0, %s231
    %s233 = sphi 0, %s231
    %s234 = sphi 0, %s233
    %s248 = sphi 0, %s234
    %s252 = sphi 0, %s252
    %s254 = sphi 0, %s252
    %s255 = sphi 0, %s254
    %s269 = sphi 0, %s255
    %s273 = sphi 0, %s273
    %s275 = sphi 0, %s273
    %s276 = sphi 0, %s275
    %s290 = sphi 0, %s276
    %s294 = sphi 0, %s294
    %s296 = sphi 0, %s294
    %s297 = sphi 0, %s296
    %s311 = sphi 0, %s297
    %s315 = sphi 0, %s315
    %s317 = sphi 0, %s315
    %s318 = sphi 0, %s317
    %s332 = sphi 0, %s318
    %s336 = sphi 0, %s336
    %s338 = sphi 0, %s336
    %s339 = sphi 0, %s338
    %s353 = sphi 0, %s339
    %s357 = sphi 0, %s357
    %s359 = sphi 0, %s357
    %s360 = sphi 0, %s359
    %s374 = sphi 0, %s360
    %s378 = sphi 0, %s378
    %s380 = sphi 0, %s378
    %s381 = sphi 0, %s380
    %s395 = sphi 0, %s381
    %s399 = sphi 0, %s399
    %s401 = sphi 0, %s399
    %s402 = sphi 0, %s401
    %s416 = sphi 0, %s402
    %s420 = sphi 0, %s420
    %s422 = sphi 0, %s420
    %s423 = sphi 0, %s422
    %s437 = sphi 0, %s423
    %s441 = sphi 0, %s441
    %s443 = sphi 0, %s441
    %s444 = sphi 0, %s443
    %s458 = sphi 0, %s444
    %s462 = sphi 0, %s462
    %s464 = sphi 0, %s462
    %s465 = sphi 0, %s464
    %s479 = sphi 0, %s465
    %s483 = sphi 0, %s483
    %s485 = sphi 0, %s483
    %s486 = sphi 0, %s485
    %s500 = sphi 0, %s486
    %s504 = sphi 0, %s504
    %s506 = sphi 0, %s504
    %s507 = sphi 0, %s506
    %s521 = sphi 0, %s507
    %s527 = sphi 0, %s529
    %s530 = sphi 0, %s527
    %s531 = sphi 0, %s530
    %s547 = sphi 0, %s531
  $region4: #{_lambda_.1} parent=0 // loop_header_branch
    %32 = sbr.rel (%p30) target = $region8
  $region5: #{_lambda_.1} parent=0 // loop_body
    %s34 = ssub.s32 %s29, 1
    %s35 = ssub.s32 %s29, 2
    %s36 = sadd.s32 %s29, 1
    %s37 = ssub.s32 %s29, %s36
    %p38 = scmp.eq.s32.totalorder %s37, 0
    %s40 = sadd.s32 %s39, 1
    %s41 = scalar_select %p38, %s39, %s40
    %p44 = pneg %p38
    %p45 = scmp.eq.s32.totalorder %s29, 1
    %p46 = por %p44, %p45
    %p47 = scmp.ne.s32.totalorder %s39, %s42
    %p48 = scmp.eq.s32.totalorder %s29, 0
    %p49 = por %p47, %p48
    %p50 = scmp.ne.s32.totalorder %s39, %s42
    %p51 = scmp.eq.s32.totalorder %s34, 1
    %p52 = por %p50, %p51
    %p53 = scmp.ne.s32.totalorder %s42, %s43
    %p54 = scmp.eq.s32.totalorder %s34, 0
    %p55 = por %p53, %p54
    %p56 = scmp.ne.s32.totalorder %s42, %s43
    %p57 = scmp.eq.s32.totalorder %s35, 1
    %p58 = por %p56, %p57
    %p60 = scmp.ne.s32.totalorder %s43, %s59
    %p61 = scmp.eq.s32.totalorder %s35, 0
    %p62 = por %p60, %p61
    %s64 = sadd.s32 %s63, 1
    %p67 = scmp.eq.s32.totalorder %s29, 1
    %p68 = scmp.ne.s32.totalorder %s63, %s65
    %p69 = scmp.eq.s32.totalorder %s29, 0
    %p70 = por %p68, %p69
    %p71 = scmp.ne.s32.totalorder %s63, %s65
    %p72 = scmp.eq.s32.totalorder %s34, 1
    %p73 = por %p71, %p72
    %p74 = scmp.ne.s32.totalorder %s65, %s66
    %p75 = scmp.eq.s32.totalorder %s34, 0
    %p76 = por %p74, %p75
    %p77 = scmp.ne.s32.totalorder %s65, %s66
    %p78 = scmp.eq.s32.totalorder %s35, 1
    %p79 = por %p77, %p78
    %p81 = scmp.ne.s32.totalorder %s66, %s80
    %p82 = scmp.eq.s32.totalorder %s35, 0
    %p83 = por %p81, %p82
    %s85 = sadd.s32 %s84, 1
    %p88 = scmp.eq.s32.totalorder %s29, 1
    %p89 = scmp.ne.s32.totalorder %s84, %s86
    %p90 = scmp.eq.s32.totalorder %s29, 0
    %p91 = por %p89, %p90
    %p92 = scmp.ne.s32.totalorder %s84, %s86
    %p93 = scmp.eq.s32.totalorder %s34, 1
    %p94 = por %p92, %p93
    %p95 = scmp.ne.s32.totalorder %s86, %s87
    %p96 = scmp.eq.s32.totalorder %s34, 0
    %p97 = por %p95, %p96
    %p98 = scmp.ne.s32.totalorder %s86, %s87
    %p99 = scmp.eq.s32.totalorder %s35, 1
    %p100 = por %p98, %p99
    %p102 = scmp.ne.s32.totalorder %s87, %s101
    %p103 = scmp.eq.s32.totalorder %s35, 0
    %p104 = por %p102, %p103
    %s106 = sadd.s32 %s105, 1
    %p109 = scmp.eq.s32.totalorder %s29, 1
    %p110 = scmp.ne.s32.totalorder %s105, %s107
    %p111 = scmp.eq.s32.totalorder %s29, 0
    %p112 = por %p110, %p111
    %p113 = scmp.ne.s32.totalorder %s105, %s107
    %p114 = scmp.eq.s32.totalorder %s34, 1
    %p115 = por %p113, %p114
    %p116 = scmp.ne.s32.totalorder %s107, %s108
    %p117 = scmp.eq.s32.totalorder %s34, 0
    %p118 = por %p116, %p117
    %p119 = scmp.ne.s32.totalorder %s107, %s108
    %p120 = scmp.eq.s32.totalorder %s35, 1
    %p121 = por %p119, %p120
    %p123 = scmp.ne.s32.totalorder %s108, %s122
    %p124 = scmp.eq.s32.totalorder %s35, 0
    %p125 = por %p123, %p124
    %s127 = sadd.s32 %s126, 1
    %p130 = scmp.eq.s32.totalorder %s29, 1
    %p131 = scmp.ne.s32.totalorder %s126, %s128
    %p132 = scmp.eq.s32.totalorder %s29, 0
    %p133 = por %p131, %p132
    %p134 = scmp.ne.s32.totalorder %s126, %s128
    %p135 = scmp.eq.s32.totalorder %s34, 1
    %p136 = por %p134, %p135
    %p137 = scmp.ne.s32.totalorder %s128, %s129
    %p138 = scmp.eq.s32.totalorder %s34, 0
    %p139 = por %p137, %p138
    %p140 = scmp.ne.s32.totalorder %s128, %s129
    %p141 = scmp.eq.s32.totalorder %s35, 1
    %p142 = por %p140, %p141
    %p144 = scmp.ne.s32.totalorder %s129, %s143
    %p145 = scmp.eq.s32.totalorder %s35, 0
    %p146 = por %p144, %p145
    %s148 = sadd.s32 %s147, 1
    %p151 = scmp.eq.s32.totalorder %s29, 1
    %p152 = scmp.ne.s32.totalorder %s147, %s149
    %p153 = scmp.eq.s32.totalorder %s29, 0
    %p154 = por %p152, %p153
    %p155 = scmp.ne.s32.totalorder %s147, %s149
    %p156 = scmp.eq.s32.totalorder %s34, 1
    %p157 = por %p155, %p156
    %p158 = scmp.ne.s32.totalorder %s149, %s150
    %p159 = scmp.eq.s32.totalorder %s34, 0
    %p160 = por %p158, %p159
    %p161 = scmp.ne.s32.totalorder %s149, %s150
    %p162 = scmp.eq.s32.totalorder %s35, 1
    %p163 = por %p161, %p162
    %p165 = scmp.ne.s32.totalorder %s150, %s164
    %p166 = scmp.eq.s32.totalorder %s35, 0
    %p167 = por %p165, %p166
    %s169 = sadd.s32 %s168, 1
    %p172 = scmp.eq.s32.totalorder %s29, 1
    %p173 = scmp.ne.s32.totalorder %s168, %s170
    %p174 = scmp.eq.s32.totalorder %s29, 0
    %p175 = por %p173, %p174
    %p176 = scmp.ne.s32.totalorder %s168, %s170
    %p177 = scmp.eq.s32.totalorder %s34, 1
    %p178 = por %p176, %p177
    %p179 = scmp.ne.s32.totalorder %s170, %s171
    %p180 = scmp.eq.s32.totalorder %s34, 0
    %p181 = por %p179, %p180
    %p182 = scmp.ne.s32.totalorder %s170, %s171
    %p183 = scmp.eq.s32.totalorder %s35, 1
    %p184 = por %p182, %p183
    %p186 = scmp.ne.s32.totalorder %s171, %s185
    %p187 = scmp.eq.s32.totalorder %s35, 0
    %p188 = por %p186, %p187
    %s190 = sadd.s32 %s189, 1
    %p193 = scmp.eq.s32.totalorder %s29, 1
    %p194 = scmp.ne.s32.totalorder %s189, %s191
    %p195 = scmp.eq.s32.totalorder %s29, 0
    %p196 = por %p194, %p195
    %p197 = scmp.ne.s32.totalorder %s189, %s191
    %p198 = scmp.eq.s32.totalorder %s34, 1
    %p199 = por %p197, %p198
    %p200 = scmp.ne.s32.totalorder %s191, %s192
    %p201 = scmp.eq.s32.totalorder %s34, 0
    %p202 = por %p200, %p201
    %p203 = scmp.ne.s32.totalorder %s191, %s192
    %p204 = scmp.eq.s32.totalorder %s35, 1
    %p205 = por %p203, %p204
    %p207 = scmp.ne.s32.totalorder %s192, %s206
    %p208 = scmp.eq.s32.totalorder %s35, 0
    %p209 = por %p207, %p208
    %s211 = sadd.s32 %s210, 1
    %p214 = scmp.eq.s32.totalorder %s29, 1
    %p215 = scmp.ne.s32.totalorder %s210, %s212
    %p216 = scmp.eq.s32.totalorder %s29, 0
    %p217 = por %p215, %p216
    %p218 = scmp.ne.s32.totalorder %s210, %s212
    %p219 = scmp.eq.s32.totalorder %s34, 1
    %p220 = por %p218, %p219
    %p221 = scmp.ne.s32.totalorder %s212, %s213
    %p222 = scmp.eq.s32.totalorder %s34, 0
    %p223 = por %p221, %p222
    %p224 = scmp.ne.s32.totalorder %s212, %s213
    %p225 = scmp.eq.s32.totalorder %s35, 1
    %p226 = por %p224, %p225
    %p228 = scmp.ne.s32.totalorder %s213, %s227
    %p229 = scmp.eq.s32.totalorder %s35, 0
    %p230 = por %p228, %p229
    %s232 = sadd.s32 %s231, 1
    %p235 = scmp.eq.s32.totalorder %s29, 1
    %p236 = scmp.ne.s32.totalorder %s231, %s233
    %p237 = scmp.eq.s32.totalorder %s29, 0
    %p238 = por %p236, %p237
    %p239 = scmp.ne.s32.totalorder %s231, %s233
    %p240 = scmp.eq.s32.totalorder %s34, 1
    %p241 = por %p239, %p240
    %p242 = scmp.ne.s32.totalorder %s233, %s234
    %p243 = scmp.eq.s32.totalorder %s34, 0
    %p244 = por %p242, %p243
    %p245 = scmp.ne.s32.totalorder %s233, %s234
    %p246 = scmp.eq.s32.totalorder %s35, 1
    %p247 = por %p245, %p246
    %p249 = scmp.ne.s32.totalorder %s234, %s248
    %p250 = scmp.eq.s32.totalorder %s35, 0
    %p251 = por %p249, %p250
    %s253 = sadd.s32 %s252, 1
    %p256 = scmp.eq.s32.totalorder %s29, 1
    %p257 = scmp.ne.s32.totalorder %s252, %s254
    %p258 = scmp.eq.s32.totalorder %s29, 0
    %p259 = por %p257, %p258
    %p260 = scmp.ne.s32.totalorder %s252, %s254
    %p261 = scmp.eq.s32.totalorder %s34, 1
    %p262 = por %p260, %p261
    %p263 = scmp.ne.s32.totalorder %s254, %s255
    %p264 = scmp.eq.s32.totalorder %s34, 0
    %p265 = por %p263, %p264
    %p266 = scmp.ne.s32.totalorder %s254, %s255
    %p267 = scmp.eq.s32.totalorder %s35, 1
    %p268 = por %p266, %p267
    %p270 = scmp.ne.s32.totalorder %s255, %s269
    %p271 = scmp.eq.s32.totalorder %s35, 0
    %p272 = por %p270, %p271
    %s274 = sadd.s32 %s273, 1
    %p277 = scmp.eq.s32.totalorder %s29, 1
    %p278 = scmp.ne.s32.totalorder %s273, %s275
    %p279 = scmp.eq.s32.totalorder %s29, 0
    %p280 = por %p278, %p279
    %p281 = scmp.ne.s32.totalorder %s273, %s275
    %p282 = scmp.eq.s32.totalorder %s34, 1
    %p283 = por %p281, %p282
    %p284 = scmp.ne.s32.totalorder %s275, %s276
    %p285 = scmp.eq.s32.totalorder %s34, 0
    %p286 = por %p284, %p285
    %p287 = scmp.ne.s32.totalorder %s275, %s276
    %p288 = scmp.eq.s32.totalorder %s35, 1
    %p289 = por %p287, %p288
    %p291 = scmp.ne.s32.totalorder %s276, %s290
    %p292 = scmp.eq.s32.totalorder %s35, 0
    %p293 = por %p291, %p292
    %s295 = sadd.s32 %s294, 1
    %p298 = scmp.eq.s32.totalorder %s29, 1
    %p299 = scmp.ne.s32.totalorder %s294, %s296
    %p300 = scmp.eq.s32.totalorder %s29, 0
    %p301 = por %p299, %p300
    %p302 = scmp.ne.s32.totalorder %s294, %s296
    %p303 = scmp.eq.s32.totalorder %s34, 1
    %p304 = por %p302, %p303
    %p305 = scmp.ne.s32.totalorder %s296, %s297
    %p306 = scmp.eq.s32.totalorder %s34, 0
    %p307 = por %p305, %p306
    %p308 = scmp.ne.s32.totalorder %s296, %s297
    %p309 = scmp.eq.s32.totalorder %s35, 1
    %p310 = por %p308, %p309
    %p312 = scmp.ne.s32.totalorder %s297, %s311
    %p313 = scmp.eq.s32.totalorder %s35, 0
    %p314 = por %p312, %p313
    %s316 = sadd.s32 %s315, 1
    %p319 = scmp.eq.s32.totalorder %s29, 1
    %p320 = scmp.ne.s32.totalorder %s315, %s317
    %p321 = scmp.eq.s32.totalorder %s29, 0
    %p322 = por %p320, %p321
    %p323 = scmp.ne.s32.totalorder %s315, %s317
    %p324 = scmp.eq.s32.totalorder %s34, 1
    %p325 = por %p323, %p324
    %p326 = scmp.ne.s32.totalorder %s317, %s318
    %p327 = scmp.eq.s32.totalorder %s34, 0
    %p328 = por %p326, %p327
    %p329 = scmp.ne.s32.totalorder %s317, %s318
    %p330 = scmp.eq.s32.totalorder %s35, 1
    %p331 = por %p329, %p330
    %p333 = scmp.ne.s32.totalorder %s318, %s332
    %p334 = scmp.eq.s32.totalorder %s35, 0
    %p335 = por %p333, %p334
    %s337 = sadd.s32 %s336, 1
    %p340 = scmp.eq.s32.totalorder %s29, 1
    %p341 = scmp.ne.s32.totalorder %s336, %s338
    %p342 = scmp.eq.s32.totalorder %s29, 0
    %p343 = por %p341, %p342
    %p344 = scmp.ne.s32.totalorder %s336, %s338
    %p345 = scmp.eq.s32.totalorder %s34, 1
    %p346 = por %p344, %p345
    %p347 = scmp.ne.s32.totalorder %s338, %s339
    %p348 = scmp.eq.s32.totalorder %s34, 0
    %p349 = por %p347, %p348
    %p350 = scmp.ne.s32.totalorder %s338, %s339
    %p351 = scmp.eq.s32.totalorder %s35, 1
    %p352 = por %p350, %p351
    %p354 = scmp.ne.s32.totalorder %s339, %s353
    %p355 = scmp.eq.s32.totalorder %s35, 0
    %p356 = por %p354, %p355
    %s358 = sadd.s32 %s357, 1
    %p361 = scmp.eq.s32.totalorder %s29, 1
    %p362 = scmp.ne.s32.totalorder %s357, %s359
    %p363 = scmp.eq.s32.totalorder %s29, 0
    %p364 = por %p362, %p363
    %p365 = scmp.ne.s32.totalorder %s357, %s359
    %p366 = scmp.eq.s32.totalorder %s34, 1
    %p367 = por %p365, %p366
    %p368 = scmp.ne.s32.totalorder %s359, %s360
    %p369 = scmp.eq.s32.totalorder %s34, 0
    %p370 = por %p368, %p369
    %p371 = scmp.ne.s32.totalorder %s359, %s360
    %p372 = scmp.eq.s32.totalorder %s35, 1
    %p373 = por %p371, %p372
    %p375 = scmp.ne.s32.totalorder %s360, %s374
    %p376 = scmp.eq.s32.totalorder %s35, 0
    %p377 = por %p375, %p376
    %s379 = sadd.s32 %s378, 1
    %p382 = scmp.eq.s32.totalorder %s29, 1
    %p383 = scmp.ne.s32.totalorder %s378, %s380
    %p384 = scmp.eq.s32.totalorder %s29, 0
    %p385 = por %p383, %p384
    %p386 = scmp.ne.s32.totalorder %s378, %s380
    %p387 = scmp.eq.s32.totalorder %s34, 1
    %p388 = por %p386, %p387
    %p389 = scmp.ne.s32.totalorder %s380, %s381
    %p390 = scmp.eq.s32.totalorder %s34, 0
    %p391 = por %p389, %p390
    %p392 = scmp.ne.s32.totalorder %s380, %s381
    %p393 = scmp.eq.s32.totalorder %s35, 1
    %p394 = por %p392, %p393
    %p396 = scmp.ne.s32.totalorder %s381, %s395
    %p397 = scmp.eq.s32.totalorder %s35, 0
    %p398 = por %p396, %p397
    %s400 = sadd.s32 %s399, 1
    %p403 = scmp.eq.s32.totalorder %s29, 1
    %p404 = scmp.ne.s32.totalorder %s399, %s401
    %p405 = scmp.eq.s32.totalorder %s29, 0
    %p406 = por %p404, %p405
    %p407 = scmp.ne.s32.totalorder %s399, %s401
    %p408 = scmp.eq.s32.totalorder %s34, 1
    %p409 = por %p407, %p408
    %p410 = scmp.ne.s32.totalorder %s401, %s402
    %p411 = scmp.eq.s32.totalorder %s34, 0
    %p412 = por %p410, %p411
    %p413 = scmp.ne.s32.totalorder %s401, %s402
    %p414 = scmp.eq.s32.totalorder %s35, 1
    %p415 = por %p413, %p414
    %p417 = scmp.ne.s32.totalorder %s402, %s416
    %p418 = scmp.eq.s32.totalorder %s35, 0
    %p419 = por %p417, %p418
    %s421 = sadd.s32 %s420, 1
    %p424 = scmp.eq.s32.totalorder %s29, 1
    %p425 = scmp.ne.s32.totalorder %s420, %s422
    %p426 = scmp.eq.s32.totalorder %s29, 0
    %p427 = por %p425, %p426
    %p428 = scmp.ne.s32.totalorder %s420, %s422
    %p429 = scmp.eq.s32.totalorder %s34, 1
    %p430 = por %p428, %p429
    %p431 = scmp.ne.s32.totalorder %s422, %s423
    %p432 = scmp.eq.s32.totalorder %s34, 0
    %p433 = por %p431, %p432
    %p434 = scmp.ne.s32.totalorder %s422, %s423
    %p435 = scmp.eq.s32.totalorder %s35, 1
    %p436 = por %p434, %p435
    %p438 = scmp.ne.s32.totalorder %s423, %s437
    %p439 = scmp.eq.s32.totalorder %s35, 0
    %p440 = por %p438, %p439
    %s442 = sadd.s32 %s441, 1
    %p445 = scmp.eq.s32.totalorder %s29, 1
    %p446 = scmp.ne.s32.totalorder %s441, %s443
    %p447 = scmp.eq.s32.totalorder %s29, 0
    %p448 = por %p446, %p447
    %p449 = scmp.ne.s32.totalorder %s441, %s443
    %p450 = scmp.eq.s32.totalorder %s34, 1
    %p451 = por %p449, %p450
    %p452 = scmp.ne.s32.totalorder %s443, %s444
    %p453 = scmp.eq.s32.totalorder %s34, 0
    %p454 = por %p452, %p453
    %p455 = scmp.ne.s32.totalorder %s443, %s444
    %p456 = scmp.eq.s32.totalorder %s35, 1
    %p457 = por %p455, %p456
    %p459 = scmp.ne.s32.totalorder %s444, %s458
    %p460 = scmp.eq.s32.totalorder %s35, 0
    %p461 = por %p459, %p460
    %s463 = sadd.s32 %s462, 1
    %p466 = scmp.eq.s32.totalorder %s29, 1
    %p467 = scmp.ne.s32.totalorder %s462, %s464
    %p468 = scmp.eq.s32.totalorder %s29, 0
    %p469 = por %p467, %p468
    %p470 = scmp.ne.s32.totalorder %s462, %s464
    %p471 = scmp.eq.s32.totalorder %s34, 1
    %p472 = por %p470, %p471
    %p473 = scmp.ne.s32.totalorder %s464, %s465
    %p474 = scmp.eq.s32.totalorder %s34, 0
    %p475 = por %p473, %p474
    %p476 = scmp.ne.s32.totalorder %s464, %s465
    %p477 = scmp.eq.s32.totalorder %s35, 1
    %p478 = por %p476, %p477
    %p480 = scmp.ne.s32.totalorder %s465, %s479
    %p481 = scmp.eq.s32.totalorder %s35, 0
    %p482 = por %p480, %p481
    %s484 = sadd.s32 %s483, 1
    %p487 = scmp.eq.s32.totalorder %s29, 1
    %p488 = scmp.ne.s32.totalorder %s483, %s485
    %p489 = scmp.eq.s32.totalorder %s29, 0
    %p490 = por %p488, %p489
    %p491 = scmp.ne.s32.totalorder %s483, %s485
    %p492 = scmp.eq.s32.totalorder %s34, 1
    %p493 = por %p491, %p492
    %p494 = scmp.ne.s32.totalorder %s485, %s486
    %p495 = scmp.eq.s32.totalorder %s34, 0
    %p496 = por %p494, %p495
    %p497 = scmp.ne.s32.totalorder %s485, %s486
    %p498 = scmp.eq.s32.totalorder %s35, 1
    %p499 = por %p497, %p498
    %p501 = scmp.ne.s32.totalorder %s486, %s500
    %p502 = scmp.eq.s32.totalorder %s35, 0
    %p503 = por %p501, %p502
    %s505 = sadd.s32 %s504, 1
    %p508 = scmp.eq.s32.totalorder %s29, 1
    %p509 = scmp.ne.s32.totalorder %s504, %s506
    %p510 = scmp.eq.s32.totalorder %s29, 0
    %p511 = por %p509, %p510
    %p512 = scmp.ne.s32.totalorder %s504, %s506
    %p513 = scmp.eq.s32.totalorder %s34, 1
    %p514 = por %p512, %p513
    %p515 = scmp.ne.s32.totalorder %s506, %s507
    %p516 = scmp.eq.s32.totalorder %s34, 0
    %p517 = por %p515, %p516
    %p518 = scmp.ne.s32.totalorder %s506, %s507
    %p519 = scmp.eq.s32.totalorder %s35, 1
    %p520 = por %p518, %p519
    %p522 = scmp.ne.s32.totalorder %s507, %s521
    %p523 = scmp.eq.s32.totalorder %s35, 0
    %p524 = por %p522, %p523
    %s525 = ssub.s32 %s29, %s36
    %p526 = scmp.eq.s32.totalorder %s525, 0
    %s528 = sadd.s32 %s527, 1
    %s529 = scalar_select %p526, %s527, %s528
    %p532 = pneg %p526
    %p533 = scmp.eq.s32.totalorder %s29, 1
    %p534 = por %p532, %p533
    %p535 = scmp.ne.s32.totalorder %s527, %s530
    %p536 = scmp.eq.s32.totalorder %s29, 0
    %p537 = por %p535, %p536
    %p538 = scmp.ne.s32.totalorder %s527, %s530
    %p539 = scmp.eq.s32.totalorder %s34, 1
    %p540 = por %p538, %p539
    %p541 = scmp.ne.s32.totalorder %s530, %s531
    %p542 = scmp.eq.s32.totalorder %s34, 0
    %p543 = por %p541, %p542
    %p544 = scmp.ne.s32.totalorder %s530, %s531
    %p545 = scmp.eq.s32.totalorder %s35, 1
    %p546 = por %p544, %p545
    %p548 = scmp.ne.s32.totalorder %s531, %s547
    %p549 = scmp.eq.s32.totalorder %s35, 0
    %p550 = por %p548, %p549
    %p551 = scmp.le.s32.totalorder 1, %s29
    %p552 = scmp.lt.s32.totalorder %s29, 3
    %p553 = pnand %p551, %p552
    %p554 = pneg %p553
    // Predicated region
    $region9: #{_lambda_.1} parent=5 // pred_check
      _
    $region10: #{_lambda_.1} parent=5 // pred_check_branch
      %556 = sbr.rel (%p553) target = $region12
    $region11: #{_lambda_.1} parent=5 // pred_region
      %s557 = ssub.s32 %s29, 1
      // Predicated region
      $region13: #{_lambda_.1} parent=11 // pred_check
        %p558 = pneg %p76
      $region14: #{_lambda_.1} parent=11 // pred_check_branch
        %560 = sbr.rel (%p558) target = $region16
      $region15: #{_lambda_.1} parent=11 // pred_region
        _
      $region16: #{_lambda_.1} parent=11 // pred_fallthru
        _
      // Predicated region
      $region17: #{_lambda_.1} parent=11 // pred_check
        %p561 = pneg %p97
      $region18: #{_lambda_.1} parent=11 // pred_check_branch
        %563 = sbr.rel (%p561) target = $region20
      $region19: #{_lambda_.1} parent=11 // pred_region
        _
      $region20: #{_lambda_.1} parent=11 // pred_fallthru
        _
      // Predicated region
      $region21: #{_lambda_.1} parent=11 // pred_check
        %p564 = pneg %p118
      $region22: #{_lambda_.1} parent=11 // pred_check_branch
        %566 = sbr.rel (%p564) target = $region24
      $region23: #{_lambda_.1} parent=11 // pred_region
        _
      $region24: #{_lambda_.1} parent=11 // pred_fallthru
        _
      // Predicated region
      $region25: #{_lambda_.1} parent=11 // pred_check
        %p567 = pneg %p139
      $region26: #{_lambda_.1} parent=11 // pred_check_branch
        %569 = sbr.rel (%p567) target = $region28
      $region27: #{_lambda_.1} parent=11 // pred_region
        _
      $region28: #{_lambda_.1} parent=11 // pred_fallthru
        _
      // Predicated region
      $region29: #{_lambda_.1} parent=11 // pred_check
        %p570 = pneg %p160
      $region30: #{_lambda_.1} parent=11 // pred_check_branch
        %572 = sbr.rel (%p570) target = $region32
      $region31: #{_lambda_.1} parent=11 // pred_region
        _
      $region32: #{_lambda_.1} parent=11 // pred_fallthru
        _
      // Predicated region
      $region33: #{_lambda_.1} parent=11 // pred_check
        %p573 = pneg %p181
      $region34: #{_lambda_.1} parent=11 // pred_check_branch
        %575 = sbr.rel (%p573) target = $region36
      $region35: #{_lambda_.1} parent=11 // pred_region
        _
      $region36: #{_lambda_.1} parent=11 // pred_fallthru
        _
      // Predicated region
      $region37: #{_lambda_.1} parent=11 // pred_check
        %p576 = pneg %p202
      $region38: #{_lambda_.1} parent=11 // pred_check_branch
        %578 = sbr.rel (%p576) target = $region40
      $region39: #{_lambda_.1} parent=11 // pred_region
        _
      $region40: #{_lambda_.1} parent=11 // pred_fallthru
        _
      // Predicated region
      $region41: #{_lambda_.1} parent=11 // pred_check
        %p579 = pneg %p223
      $region42: #{_lambda_.1} parent=11 // pred_check_branch
        %581 = sbr.rel (%p579) target = $region44
      $region43: #{_lambda_.1} parent=11 // pred_region
        _
      $region44: #{_lambda_.1} parent=11 // pred_fallthru
        _
      // Predicated region
      $region45: #{_lambda_.1} parent=11 // pred_check
        %p582 = pneg %p244
      $region46: #{_lambda_.1} parent=11 // pred_check_branch
        %584 = sbr.rel (%p582) target = $region48
      $region47: #{_lambda_.1} parent=11 // pred_region
        _
      $region48: #{_lambda_.1} parent=11 // pred_fallthru
        _
      // Predicated region
      $region49: #{_lambda_.1} parent=11 // pred_check
        %p585 = pneg %p265
      $region50: #{_lambda_.1} parent=11 // pred_check_branch
        %587 = sbr.rel (%p585) target = $region52
      $region51: #{_lambda_.1} parent=11 // pred_region
        _
      $region52: #{_lambda_.1} parent=11 // pred_fallthru
        _
      // Predicated region
      $region53: #{_lambda_.1} parent=11 // pred_check
        %p588 = pneg %p286
      $region54: #{_lambda_.1} parent=11 // pred_check_branch
        %590 = sbr.rel (%p588) target = $region56
      $region55: #{_lambda_.1} parent=11 // pred_region
        _
      $region56: #{_lambda_.1} parent=11 // pred_fallthru
        _
      // Predicated region
      $region57: #{_lambda_.1} parent=11 // pred_check
        %p591 = pneg %p307
      $region58: #{_lambda_.1} parent=11 // pred_check_branch
        %593 = sbr.rel (%p591) target = $region60
      $region59: #{_lambda_.1} parent=11 // pred_region
        _
      $region60: #{_lambda_.1} parent=11 // pred_fallthru
        _
      // Predicated region
      $region61: #{_lambda_.1} parent=11 // pred_check
        %p594 = pneg %p328
      $region62: #{_lambda_.1} parent=11 // pred_check_branch
        %596 = sbr.rel (%p594) target = $region64
      $region63: #{_lambda_.1} parent=11 // pred_region
        _
      $region64: #{_lambda_.1} parent=11 // pred_fallthru
        _
      // Predicated region
      $region65: #{_lambda_.1} parent=11 // pred_check
        %p597 = pneg %p349
      $region66: #{_lambda_.1} parent=11 // pred_check_branch
        %599 = sbr.rel (%p597) target = $region68
      $region67: #{_lambda_.1} parent=11 // pred_region
        _
      $region68: #{_lambda_.1} parent=11 // pred_fallthru
        _
      // Predicated region
      $region69: #{_lambda_.1} parent=11 // pred_check
        %p600 = pneg %p370
      $region70: #{_lambda_.1} parent=11 // pred_check_branch
        %602 = sbr.rel (%p600) target = $region72
      $region71: #{_lambda_.1} parent=11 // pred_region
        _
      $region72: #{_lambda_.1} parent=11 // pred_fallthru
        _
      // Predicated region
      $region73: #{_lambda_.1} parent=11 // pred_check
        %p603 = pneg %p391
      $region74: #{_lambda_.1} parent=11 // pred_check_branch
        %605 = sbr.rel (%p603) target = $region76
      $region75: #{_lambda_.1} parent=11 // pred_region
        _
      $region76: #{_lambda_.1} parent=11 // pred_fallthru
        _
      // Predicated region
      $region77: #{_lambda_.1} parent=11 // pred_check
        %p606 = pneg %p412
      $region78: #{_lambda_.1} parent=11 // pred_check_branch
        %608 = sbr.rel (%p606) target = $region80
      $region79: #{_lambda_.1} parent=11 // pred_region
        _
      $region80: #{_lambda_.1} parent=11 // pred_fallthru
        _
      // Predicated region
      $region81: #{_lambda_.1} parent=11 // pred_check
        %p609 = pneg %p433
      $region82: #{_lambda_.1} parent=11 // pred_check_branch
        %611 = sbr.rel (%p609) target = $region84
      $region83: #{_lambda_.1} parent=11 // pred_region
        _
      $region84: #{_lambda_.1} parent=11 // pred_fallthru
        _
      // Predicated region
      $region85: #{_lambda_.1} parent=11 // pred_check
        %p612 = pneg %p454
      $region86: #{_lambda_.1} parent=11 // pred_check_branch
        %614 = sbr.rel (%p612) target = $region88
      $region87: #{_lambda_.1} parent=11 // pred_region
        _
      $region88: #{_lambda_.1} parent=11 // pred_fallthru
        _
      // Predicated region
      $region89: #{_lambda_.1} parent=11 // pred_check
        %p615 = pneg %p475
      $region90: #{_lambda_.1} parent=11 // pred_check_branch
        %617 = sbr.rel (%p615) target = $region92
      $region91: #{_lambda_.1} parent=11 // pred_region
        _
      $region92: #{_lambda_.1} parent=11 // pred_fallthru
        _
      // Predicated region
      $region93: #{_lambda_.1} parent=11 // pred_check
        %p618 = pneg %p496
      $region94: #{_lambda_.1} parent=11 // pred_check_branch
        %620 = sbr.rel (%p618) target = $region96
      $region95: #{_lambda_.1} parent=11 // pred_region
        _
      $region96: #{_lambda_.1} parent=11 // pred_fallthru
        _
      // Predicated region
      $region97: #{_lambda_.1} parent=11 // pred_check
        %p621 = pneg %p517
      $region98: #{_lambda_.1} parent=11 // pred_check_branch
        %623 = sbr.rel (%p621) target = $region100
      $region99: #{_lambda_.1} parent=11 // pred_region
        _
      $region100: #{_lambda_.1} parent=11 // pred_fallthru
        _
    $region12: #{_lambda_.1} parent=5 // pred_fallthru
      _
    %p624 = scmp.lt.s32.totalorder %s29, 2
    // Predicated region
    $region101: #{_lambda_.1} parent=5 // pred_check
      %p625 = pneg %p624
    $region102: #{_lambda_.1} parent=5 // pred_check_branch
      %627 = sbr.rel (%p625) target = $region104
    $region103: #{_lambda_.1} parent=5 // pred_region
      // Predicated region
      $region105: #{_lambda_.1} parent=103 // pred_check
        %p628 = pneg %p49
      $region106: #{_lambda_.1} parent=103 // pred_check_branch
        %630 = sbr.rel (%p628) target = $region108
      $region107: #{_lambda_.1} parent=103 // pred_region
        %p631 = scmp.lt.s32.totalorder %s29, 1
        %s632 = scalar_select %p631, %s29, 1
        %s633 = smul.addr %s632, 6
        %s634 = smul.addr %s633, 8
        %s635 = scalar_lea.vmem %s0, %s634
      $region108: #{_lambda_.1} parent=103 // pred_fallthru
        _
    $region104: #{_lambda_.1} parent=5 // pred_fallthru
      _
    %p636 = scmp.le.s32.totalorder 1, %s29
    %p637 = scmp.lt.s32.totalorder %s29, 3
    %p638 = pnand %p636, %p637
    %p639 = pneg %p638
    // Predicated region
    $region109: #{_lambda_.1} parent=5 // pred_check
      _
    $region110: #{_lambda_.1} parent=5 // pred_check_branch
      %641 = sbr.rel (%p638) target = $region112
    $region111: #{_lambda_.1} parent=5 // pred_region
      %s642 = ssub.s32 %s29, 1
      %p643 = scmp.lt.s32.totalorder %s34, 1
      %s644 = scalar_select %p643, %s34, 1
      %s645 = smul.addr %s644, 6
      %s646 = smul.addr %s645, 8
      %s647 = scalar_lea.vmem %s0, %s646
      %p648 = pneg %p55
      %p649 = pneg %p52
      %p650 = pneg %p76
      %p651 = pneg %p73
      %p652 = pneg %p97
      %p653 = pneg %p94
      %p654 = pneg %p118
      %p655 = pneg %p115
      %p656 = pneg %p139
      %p657 = pneg %p136
      %p658 = pneg %p160
      %p659 = pneg %p157
      %p660 = pneg %p181
      %p661 = pneg %p178
      %p662 = pneg %p202
      %p663 = pneg %p199
      %p664 = pneg %p223
      %p665 = pneg %p220
      %p666 = pneg %p244
      %p667 = pneg %p241
      %p668 = pneg %p265
      %p669 = pneg %p262
      %p670 = pneg %p286
      %p671 = pneg %p283
      %p672 = pneg %p307
      %p673 = pneg %p304
      %p674 = pneg %p328
      %p675 = pneg %p325
      %p676 = pneg %p349
      %p677 = pneg %p346
      %p678 = pneg %p370
      %p679 = pneg %p367
      %p680 = pneg %p391
      %p681 = pneg %p388
      %p682 = pneg %p412
      %p683 = pneg %p409
      %p684 = pneg %p433
      %p685 = pneg %p430
      %p686 = pneg %p454
      %p687 = pneg %p451
      %p688 = pneg %p475
      %p689 = pneg %p472
      %p690 = pneg %p496
      %p691 = pneg %p493
      %p692 = pneg %p517
      %p693 = pneg %p514
      %p694 = pneg %p543
      %p695 = pneg %p540
      %p696 = scmp.lt.s32.totalorder %s34, 1
      %s697 = scalar_select %p696, %s34, 1
      %s698 = smul.addr %s697, 8
      %s699 = smul.addr %s698, 8
      %s700 = scalar_lea.vmem %s23, %s699
      %p701 = scmp.lt.s32.totalorder %s34, 1
      %s702 = scalar_select %p701, %s34, 1
      %s703 = smul.addr %s702, 6
      %s704 = smul.addr %s703, 8
      %s705 = scalar_lea.vmem %s0, %s704
      %p706 = scmp.lt.s32.totalorder %s34, 1
      %s707 = scalar_select %p706, %s34, 1
      %s708 = smul.addr %s707, 8
      %s709 = smul.addr %s708, 8
      %s710 = scalar_lea.vmem %s23, %s709
      %v711 = vld [vmem:[%s1] sm:$0xff]
      %v712 = vld [vmem:[%s705] sm:$0xff]
      %v713 = vld [vmem:[%s705 + $0x8] sm:$0xff]
      %v714 = vld [vmem:[%s705 + $0x10] sm:$0xff]
      %v715 = vld [vmem:[%s705 + $0x18] sm:$0xff]
      %v716 = vld [vmem:[%s705 + $0x20] sm:$0xff]
      %v717 = vld [vmem:[%s705 + $0x28] sm:$0xff]
      %v718 = vld [vmem:[%s2] sm:$0xff]
      %720 = vset.pattern.permute.xlu0 0
      %721 = vperm.xlu0 %720, %v718
      %v722 = vpop.permute.xlu0 %721
      %vm724 = vcmask 392192
      %v726 = vsel %vm724, %v711, 0
      %728 = vmatpush.msra.mxu0 0.0
      %729 = vmatpush.msra.mxu0 0.0
      %730 = vmatpush.msra.mxu0 0.0
      %731 = vmatpush.msra.mxu0 0.0
      %732 = vmatpush.msra.mxu0 0.0
      %733 = vmatpush.msra.mxu0 0.0
      %734 = vmatpush.msra.mxu0 0.0
      %735 = vmatpush.msra.mxu0 0.0
      %736 = vmatpush.msra.mxu0 0.0
      %737 = vmatpush.msra.mxu0 0.0
      %738 = vmatpush.msra.mxu0 %v717
      %739 = vmatpush.msra.mxu0 %v716
      %740 = vmatpush.msra.mxu0 %v715
      %741 = vmatpush.msra.mxu0 %v714
      %742 = vmatpush.msra.mxu0 %v713
      %743 = vmatpush.msra.mxu0 %v712
      %744 = vmatmul.f32.gmra.mxu0 %v726
      %v745 = vpop.f32.mrf.mxu0
      %v746 = vadd.f32 %v722, %v745
      %747 = vdwg.mxu0
      %v748 = vmax.f32 %v746, 0.0
      %v749 = vld [vmem:[%s3] sm:$0xff]
      %v750 = vld [vmem:[%s3 + $0x8] sm:$0xff]
      %v751 = vld [vmem:[%s4] sm:$0xff]
      %v752 = vld [vmem:[%s4 + $0x8] sm:$0xff]
      %v753 = vld [vmem:[%s4 + $0x10] sm:$0xff]
      %v754 = vld [vmem:[%s4 + $0x18] sm:$0xff]
      %v755 = vld [vmem:[%s4 + $0x20] sm:$0xff]
      %v756 = vld [vmem:[%s4 + $0x28] sm:$0xff]
      %v757 = vld [vmem:[%s4 + $0x30] sm:$0xff]
      %v758 = vld [vmem:[%s4 + $0x38] sm:$0xff]
      %vm759 = vcmask 523264
      %v761 = vsel %vm759, %v748, 0
      %763 = vmatpush.msra.mxu0 0.0
      %764 = vmatpush.msra.mxu0 0.0
      %765 = vmatpush.msra.mxu0 0.0
      %766 = vmatpush.msra.mxu0 0.0
      %767 = vmatpush.msra.mxu0 0.0
      %768 = vmatpush.msra.mxu0 0.0
      %769 = vmatpush.msra.mxu0 0.0
      %770 = vmatpush.msra.mxu0 0.0
      %771 = vmatpush.msra.mxu0 %v758
      %772 = vmatpush.msra.mxu0 %v757
      %773 = vmatpush.msra.mxu0 %v756
      %774 = vmatpush.msra.mxu0 %v755
      %775 = vmatpush.msra.mxu0 %v754
      %776 = vmatpush.msra.mxu0 %v753
      %777 = vmatpush.msra.mxu0 %v752
      %778 = vmatpush.msra.mxu0 %v751
      %779 = vmatmul.f32.gmra.mxu0 %v761
      %v780 = vpop.f32.mrf.mxu0
      %v781 = vadd.f32 0.0, %v780
      %782 = vdwg.mxu0
      %s783 = scalar_lea.vmem %s3, 16
      %v784 = vld [vmem:[%s783] sm:$0xff]
      %v785 = vld [vmem:[%s783 + $0x8] sm:$0xff]
      %s786 = scalar_lea.vmem %s4, 64
      %v787 = vld [vmem:[%s786] sm:$0xff]
      %v788 = vld [vmem:[%s786 + $0x8] sm:$0xff]
      %v789 = vld [vmem:[%s786 + $0x10] sm:$0xff]
      %v790 = vld [vmem:[%s786 + $0x18] sm:$0xff]
      %v791 = vld [vmem:[%s786 + $0x20] sm:$0xff]
      %v792 = vld [vmem:[%s786 + $0x28] sm:$0xff]
      %v793 = vld [vmem:[%s786 + $0x30] sm:$0xff]
      %v794 = vld [vmem:[%s786 + $0x38] sm:$0xff]
      %795 = vmatpush.msra.mxu0 0.0
      %796 = vmatpush.msra.mxu0 0.0
      %797 = vmatpush.msra.mxu0 0.0
      %798 = vmatpush.msra.mxu0 0.0
      %799 = vmatpush.msra.mxu0 0.0
      %800 = vmatpush.msra.mxu0 0.0
      %801 = vmatpush.msra.mxu0 0.0
      %802 = vmatpush.msra.mxu0 0.0
      %803 = vmatpush.msra.mxu0 %v794
      %804 = vmatpush.msra.mxu0 %v793
      %805 = vmatpush.msra.mxu0 %v792
      %806 = vmatpush.msra.mxu0 %v791
      %807 = vmatpush.msra.mxu0 %v790
      %808 = vmatpush.msra.mxu0 %v789
      %809 = vmatpush.msra.mxu0 %v788
      %810 = vmatpush.msra.mxu0 %v787
      %811 = vmatmul.f32.gmra.mxu0 %v761
      %v812 = vpop.f32.mrf.mxu0
      %v813 = vadd.f32 0.0, %v812
      %814 = vdwg.mxu0
      %vm815 = vcmask 64512
      %v817 = vsel %vm815, %v784, 0
      %v820 = vsel %vm815, %v785, 0
      %822 = vmatpush.msra.mxu0 0.0
      %823 = vmatpush.msra.mxu0 0.0
      %824 = vmatpush.msra.mxu0 0.0
      %825 = vmatpush.msra.mxu0 0.0
      %826 = vmatpush.msra.mxu0 0.0
      %827 = vmatpush.msra.mxu0 0.0
      %828 = vmatpush.msra.mxu0 0.0
      %829 = vmatpush.msra.mxu0 0.0
      %830 = vmatpush.msra.mxu0 0.0
      %831 = vmatpush.msra.mxu0 0.0
      %832 = vmatpush.msra.mxu0 0.0
      %833 = vmatpush.msra.mxu0 0.0
      %834 = vmatpush.msra.mxu0 0.0
      %835 = vmatpush.msra.mxu0 0.0
      %836 = vmatpush.msra.mxu0 0.0
      %837 = vmatpush.msra.mxu0 %v813
      %838 = vmatmul.f32.gmra.mxu0 %v817
      %v839 = vpop.f32.mrf.mxu0
      %v840 = vadd.f32 0.0, %v839
      %841 = vmatmul.f32.gmra.mxu0 %v820
      %v842 = vpop.f32.mrf.mxu0
      %v843 = vadd.f32 0.0, %v842
      %844 = vdwg.mxu0
      %v846 = vsel %vm815, %v749, 0
      %v849 = vsel %vm815, %v750, 0
      %851 = vmatpush.msra.mxu0 0.0
      %852 = vmatpush.msra.mxu0 0.0
      %853 = vmatpush.msra.mxu0 0.0
      %854 = vmatpush.msra.mxu0 0.0
      %855 = vmatpush.msra.mxu0 0.0
      %856 = vmatpush.msra.mxu0 0.0
      %857 = vmatpush.msra.mxu0 0.0
      %858 = vmatpush.msra.mxu0 0.0
      %859 = vmatpush.msra.mxu0 0.0
      %860 = vmatpush.msra.mxu0 0.0
      %861 = vmatpush.msra.mxu0 0.0
      %862 = vmatpush.msra.mxu0 0.0
      %863 = vmatpush.msra.mxu0 0.0
      %864 = vmatpush.msra.mxu0 0.0
      %865 = vmatpush.msra.mxu0 0.0
      %866 = vmatpush.msra.mxu0 %v781
      %867 = vmatmul.f32.gmra.mxu0 %v846
      %v868 = vpop.f32.mrf.mxu0
      %v869 = vadd.f32 %v840, %v868
      %870 = vmatmul.f32.gmra.mxu0 %v849
      %v871 = vpop.f32.mrf.mxu0
      %v872 = vadd.f32 %v843, %v871
      %873 = vdwg.mxu0
      %s874 = scalar_lea.vmem %s3, 32
      %v875 = vld [vmem:[%s874] sm:$0xff]
      %v876 = vld [vmem:[%s874 + $0x8] sm:$0xff]
      %s877 = scalar_lea.vmem %s4, 128
      %v878 = vld [vmem:[%s877] sm:$0xff]
      %v879 = vld [vmem:[%s877 + $0x8] sm:$0xff]
      %v880 = vld [vmem:[%s877 + $0x10] sm:$0xff]
      %v881 = vld [vmem:[%s877 + $0x18] sm:$0xff]
      %v882 = vld [vmem:[%s877 + $0x20] sm:$0xff]
      %v883 = vld [vmem:[%s877 + $0x28] sm:$0xff]
      %v884 = vld [vmem:[%s877 + $0x30] sm:$0xff]
      %v885 = vld [vmem:[%s877 + $0x38] sm:$0xff]
      %886 = vmatpush.msra.mxu0 0.0
      %887 = vmatpush.msra.mxu0 0.0
      %888 = vmatpush.msra.mxu0 0.0
      %889 = vmatpush.msra.mxu0 0.0
      %890 = vmatpush.msra.mxu0 0.0
      %891 = vmatpush.msra.mxu0 0.0
      %892 = vmatpush.msra.mxu0 0.0
      %893 = vmatpush.msra.mxu0 0.0
      %894 = vmatpush.msra.mxu0 %v885
      %895 = vmatpush.msra.mxu0 %v884
      %896 = vmatpush.msra.mxu0 %v883
      %897 = vmatpush.msra.mxu0 %v882
      %898 = vmatpush.msra.mxu0 %v881
      %899 = vmatpush.msra.mxu0 %v880
      %900 = vmatpush.msra.mxu0 %v879
      %901 = vmatpush.msra.mxu0 %v878
      %902 = vmatmul.f32.gmra.mxu0 %v761
      %v903 = vpop.f32.mrf.mxu0
      %v904 = vadd.f32 0.0, %v903
      %905 = vdwg.mxu0
      %v907 = vsel %vm815, %v875, 0
      %v910 = vsel %vm815, %v876, 0
      %912 = vmatpush.msra.mxu0 0.0
      %913 = vmatpush.msra.mxu0 0.0
      %914 = vmatpush.msra.mxu0 0.0
      %915 = vmatpush.msra.mxu0 0.0
      %916 = vmatpush.msra.mxu0 0.0
      %917 = vmatpush.msra.mxu0 0.0
      %918 = vmatpush.msra.mxu0 0.0
      %919 = vmatpush.msra.mxu0 0.0
      %920 = vmatpush.msra.mxu0 0.0
      %921 = vmatpush.msra.mxu0 0.0
      %922 = vmatpush.msra.mxu0 0.0
      %923 = vmatpush.msra.mxu0 0.0
      %924 = vmatpush.msra.mxu0 0.0
      %925 = vmatpush.msra.mxu0 0.0
      %926 = vmatpush.msra.mxu0 0.0
      %927 = vmatpush.msra.mxu0 %v904
      %928 = vmatmul.f32.gmra.mxu0 %v907
      %v929 = vpop.f32.mrf.mxu0
      %v930 = vadd.f32 0.0, %v929
      %931 = vmatmul.f32.gmra.mxu0 %v910
      %v932 = vpop.f32.mrf.mxu0
      %v933 = vadd.f32 0.0, %v932
      %934 = vdwg.mxu0
      %v935 = vadd.f32 %v869, %v930
      %v936 = vadd.f32 %v872, %v933
      %s937 = scalar_lea.vmem %s3, 48
      %v938 = vld [vmem:[%s937] sm:$0xff]
      %v939 = vld [vmem:[%s937 + $0x8] sm:$0xff]
      %s940 = scalar_lea.vmem %s4, 192
      %v941 = vld [vmem:[%s940] sm:$0xff]
      %v942 = vld [vmem:[%s940 + $0x8] sm:$0xff]
      %v943 = vld [vmem:[%s940 + $0x10] sm:$0xff]
      %v944 = vld [vmem:[%s940 + $0x18] sm:$0xff]
      %v945 = vld [vmem:[%s940 + $0x20] sm:$0xff]
      %v946 = vld [vmem:[%s940 + $0x28] sm:$0xff]
      %v947 = vld [vmem:[%s940 + $0x30] sm:$0xff]
      %v948 = vld [vmem:[%s940 + $0x38] sm:$0xff]
      %949 = vmatpush.msra.mxu0 0.0
      %950 = vmatpush.msra.mxu0 0.0
      %951 = vmatpush.msra.mxu0 0.0
      %952 = vmatpush.msra.mxu0 0.0
      %953 = vmatpush.msra.mxu0 0.0
      %954 = vmatpush.msra.mxu0 0.0
      %955 = vmatpush.msra.mxu0 0.0
      %956 = vmatpush.msra.mxu0 0.0
      %957 = vmatpush.msra.mxu0 %v948
      %958 = vmatpush.msra.mxu0 %v947
      %959 = vmatpush.msra.mxu0 %v946
      %960 = vmatpush.msra.mxu0 %v945
      %961 = vmatpush.msra.mxu0 %v944
      %962 = vmatpush.msra.mxu0 %v943
      %963 = vmatpush.msra.mxu0 %v942
      %964 = vmatpush.msra.mxu0 %v941
      %965 = vmatmul.f32.gmra.mxu0 %v761
      %v966 = vpop.f32.mrf.mxu0
      %v967 = vadd.f32 0.0, %v966
      %968 = vdwg.mxu0
      %v970 = vsel %vm815, %v938, 0
      %v973 = vsel %vm815, %v939, 0
      %975 = vmatpush.msra.mxu0 0.0
      %976 = vmatpush.msra.mxu0 0.0
      %977 = vmatpush.msra.mxu0 0.0
      %978 = vmatpush.msra.mxu0 0.0
      %979 = vmatpush.msra.mxu0 0.0
      %980 = vmatpush.msra.mxu0 0.0
      %981 = vmatpush.msra.mxu0 0.0
      %982 = vmatpush.msra.mxu0 0.0
      %983 = vmatpush.msra.mxu0 0.0
      %984 = vmatpush.msra.mxu0 0.0
      %985 = vmatpush.msra.mxu0 0.0
      %986 = vmatpush.msra.mxu0 0.0
      %987 = vmatpush.msra.mxu0 0.0
      %988 = vmatpush.msra.mxu0 0.0
      %989 = vmatpush.msra.mxu0 0.0
      %990 = vmatpush.msra.mxu0 %v967
      %991 = vmatmul.f32.gmra.mxu0 %v970
      %v992 = vpop.f32.mrf.mxu0
      %v993 = vadd.f32 0.0, %v992
      %994 = vmatmul.f32.gmra.mxu0 %v973
      %v995 = vpop.f32.mrf.mxu0
      %v996 = vadd.f32 0.0, %v995
      %997 = vdwg.mxu0
      %v998 = vadd.f32 %v935, %v993
      %v999 = vadd.f32 %v936, %v996
      %v1000 = vld [vmem:[%s5] sm:$0xff]
      %v1001 = vld [vmem:[%s5 + $0x8] sm:$0xff]
      %1003 = vset.pattern.permute.xlu0 0
      %1004 = vperm.xlu0 %1003, %v1000
      %v1005 = vpop.permute.xlu0 %1004
      %1008 = vset.pattern.permute.xlu0 0
      %1009 = vperm.xlu0 %1008, %v1001
      %v1010 = vpop.permute.xlu0 %1009
      %v1012 = vadd.f32 %v998, %v1005
      %v1013 = vadd.f32 %v999, %v1010
      %v1014 = vmax.f32 %v1012, 0.0
      %v1015 = vmax.f32 %v1013, 0.0
      %v1016 = vld [vmem:[%s6] sm:$0xff]
      %v1017 = vld [vmem:[%s6 + $0x8] sm:$0xff]
      %v1018 = vld [vmem:[%s6 + $0x10] sm:$0xff]
      %v1019 = vld [vmem:[%s6 + $0x18] sm:$0xff]
      %v1020 = vld [vmem:[%s7] sm:$0xff]
      %v1021 = vld [vmem:[%s7 + $0x8] sm:$0xff]
      %vm1022 = vcmask 130048
      %v1024 = vsel %vm1022, %v1014, 0
      %v1027 = vsel %vm1022, %v1015, 0
      %1029 = vmatpush.msra.mxu0 0.0
      %1030 = vmatpush.msra.mxu0 0.0
      %1031 = vmatpush.msra.mxu0 0.0
      %1032 = vmatpush.msra.mxu0 0.0
      %1033 = vmatpush.msra.mxu0 0.0
      %1034 = vmatpush.msra.mxu0 0.0
      %1035 = vmatpush.msra.mxu0 0.0
      %1036 = vmatpush.msra.mxu0 0.0
      %1037 = vmatpush.msra.mxu0 0.0
      %1038 = vmatpush.msra.mxu0 0.0
      %1039 = vmatpush.msra.mxu0 0.0
      %1040 = vmatpush.msra.mxu0 0.0
      %1041 = vmatpush.msra.mxu0 0.0
      %1042 = vmatpush.msra.mxu0 0.0
      %1043 = vmatpush.msra.mxu0 %v1021
      %1044 = vmatpush.msra.mxu0 %v1020
      %1045 = vmatmul.f32.gmra.mxu0 %v1024
      %v1046 = vpop.f32.mrf.mxu0
      %v1047 = vadd.f32 0.0, %v1046
      %1048 = vmatmul.f32.gmra.mxu0 %v1027
      %v1049 = vpop.f32.mrf.mxu0
      %v1050 = vadd.f32 0.0, %v1049
      %1051 = vdwg.mxu0
      %s1052 = scalar_lea.vmem %s6, 32
      %v1053 = vld [vmem:[%s1052] sm:$0xff]
      %v1054 = vld [vmem:[%s1052 + $0x8] sm:$0xff]
      %v1055 = vld [vmem:[%s1052 + $0x10] sm:$0xff]
      %v1056 = vld [vmem:[%s1052 + $0x18] sm:$0xff]
      %s1057 = scalar_lea.vmem %s7, 16
      %v1058 = vld [vmem:[%s1057] sm:$0xff]
      %v1059 = vld [vmem:[%s1057 + $0x8] sm:$0xff]
      %1060 = vmatpush.msra.mxu0 0.0
      %1061 = vmatpush.msra.mxu0 0.0
      %1062 = vmatpush.msra.mxu0 0.0
      %1063 = vmatpush.msra.mxu0 0.0
      %1064 = vmatpush.msra.mxu0 0.0
      %1065 = vmatpush.msra.mxu0 0.0
      %1066 = vmatpush.msra.mxu0 0.0
      %1067 = vmatpush.msra.mxu0 0.0
      %1068 = vmatpush.msra.mxu0 0.0
      %1069 = vmatpush.msra.mxu0 0.0
      %1070 = vmatpush.msra.mxu0 0.0
      %1071 = vmatpush.msra.mxu0 0.0
      %1072 = vmatpush.msra.mxu0 0.0
      %1073 = vmatpush.msra.mxu0 0.0
      %1074 = vmatpush.msra.mxu0 %v1059
      %1075 = vmatpush.msra.mxu0 %v1058
      %1076 = vmatmul.f32.gmra.mxu0 %v1024
      %v1077 = vpop.f32.mrf.mxu0
      %v1078 = vadd.f32 0.0, %v1077
      %1079 = vmatmul.f32.gmra.mxu0 %v1027
      %v1080 = vpop.f32.mrf.mxu0
      %v1081 = vadd.f32 0.0, %v1080
      %1082 = vdwg.mxu0
      %v1084 = vsel %vm1022, %v1053, 0
      %v1087 = vsel %vm1022, %v1054, 0
      %v1090 = vsel %vm1022, %v1055, 0
      %v1093 = vsel %vm1022, %v1056, 0
      %1095 = vmatpush.msra.mxu0 0.0
      %1096 = vmatpush.msra.mxu0 0.0
      %1097 = vmatpush.msra.mxu0 0.0
      %1098 = vmatpush.msra.mxu0 0.0
      %1099 = vmatpush.msra.mxu0 0.0
      %1100 = vmatpush.msra.mxu0 0.0
      %1101 = vmatpush.msra.mxu0 0.0
      %1102 = vmatpush.msra.mxu0 0.0
      %1103 = vmatpush.msra.mxu0 0.0
      %1104 = vmatpush.msra.mxu0 0.0
      %1105 = vmatpush.msra.mxu0 0.0
      %1106 = vmatpush.msra.mxu0 0.0
      %1107 = vmatpush.msra.mxu0 0.0
      %1108 = vmatpush.msra.mxu0 0.0
      %1109 = vmatpush.msra.mxu0 %v1081
      %1110 = vmatpush.msra.mxu0 %v1078
      %1111 = vmatmul.f32.gmra.mxu0 %v1084
      %v1112 = vpop.f32.mrf.mxu0
      %v1113 = vadd.f32 0.0, %v1112
      %1114 = vmatmul.f32.gmra.mxu0 %v1087
      %v1115 = vpop.f32.mrf.mxu0
      %v1116 = vadd.f32 0.0, %v1115
      %1117 = vmatmul.f32.gmra.mxu0 %v1090
      %v1118 = vpop.f32.mrf.mxu0
      %v1119 = vadd.f32 0.0, %v1118
      %1120 = vmatmul.f32.gmra.mxu0 %v1093
      %v1121 = vpop.f32.mrf.mxu0
      %v1122 = vadd.f32 0.0, %v1121
      %1123 = vdwg.mxu0
      %v1125 = vsel %vm1022, %v1016, 0
      %v1128 = vsel %vm1022, %v1017, 0
      %v1131 = vsel %vm1022, %v1018, 0
      %v1134 = vsel %vm1022, %v1019, 0
      %1136 = vmatpush.msra.mxu0 0.0
      %1137 = vmatpush.msra.mxu0 0.0
      %1138 = vmatpush.msra.mxu0 0.0
      %1139 = vmatpush.msra.mxu0 0.0
      %1140 = vmatpush.msra.mxu0 0.0
      %1141 = vmatpush.msra.mxu0 0.0
      %1142 = vmatpush.msra.mxu0 0.0
      %1143 = vmatpush.msra.mxu0 0.0
      %1144 = vmatpush.msra.mxu0 0.0
      %1145 = vmatpush.msra.mxu0 0.0
      %1146 = vmatpush.msra.mxu0 0.0
      %1147 = vmatpush.msra.mxu0 0.0
      %1148 = vmatpush.msra.mxu0 0.0
      %1149 = vmatpush.msra.mxu0 0.0
      %1150 = vmatpush.msra.mxu0 %v1050
      %1151 = vmatpush.msra.mxu0 %v1047
      %1152 = vmatmul.f32.gmra.mxu0 %v1125
      %v1153 = vpop.f32.mrf.mxu0
      %v1154 = vadd.f32 %v1113, %v1153
      %1155 = vmatmul.f32.gmra.mxu0 %v1128
      %v1156 = vpop.f32.mrf.mxu0
      %v1157 = vadd.f32 %v1116, %v1156
      %1158 = vmatmul.f32.gmra.mxu0 %v1131
      %v1159 = vpop.f32.mrf.mxu0
      %v1160 = vadd.f32 %v1119, %v1159
      %1161 = vmatmul.f32.gmra.mxu0 %v1134
      %v1162 = vpop.f32.mrf.mxu0
      %v1163 = vadd.f32 %v1122, %v1162
      %1164 = vdwg.mxu0
      %s1165 = scalar_lea.vmem %s6, 64
      %v1166 = vld [vmem:[%s1165] sm:$0xff]
      %v1167 = vld [vmem:[%s1165 + $0x8] sm:$0xff]
      %v1168 = vld [vmem:[%s1165 + $0x10] sm:$0xff]
      %v1169 = vld [vmem:[%s1165 + $0x18] sm:$0xff]
      %s1170 = scalar_lea.vmem %s7, 32
      %v1171 = vld [vmem:[%s1170] sm:$0xff]
      %v1172 = vld [vmem:[%s1170 + $0x8] sm:$0xff]
      %1173 = vmatpush.msra.mxu0 0.0
      %1174 = vmatpush.msra.mxu0 0.0
      %1175 = vmatpush.msra.mxu0 0.0
      %1176 = vmatpush.msra.mxu0 0.0
      %1177 = vmatpush.msra.mxu0 0.0
      %1178 = vmatpush.msra.mxu0 0.0
      %1179 = vmatpush.msra.mxu0 0.0
      %1180 = vmatpush.msra.mxu0 0.0
      %1181 = vmatpush.msra.mxu0 0.0
      %1182 = vmatpush.msra.mxu0 0.0
      %1183 = vmatpush.msra.mxu0 0.0
      %1184 = vmatpush.msra.mxu0 0.0
      %1185 = vmatpush.msra.mxu0 0.0
      %1186 = vmatpush.msra.mxu0 0.0
      %1187 = vmatpush.msra.mxu0 %v1172
      %1188 = vmatpush.msra.mxu0 %v1171
      %1189 = vmatmul.f32.gmra.mxu0 %v1024
      %v1190 = vpop.f32.mrf.mxu0
      %v1191 = vadd.f32 0.0, %v1190
      %1192 = vmatmul.f32.gmra.mxu0 %v1027
      %v1193 = vpop.f32.mrf.mxu0
      %v1194 = vadd.f32 0.0, %v1193
      %1195 = vdwg.mxu0
      %v1197 = vsel %vm1022, %v1166, 0
      %v1200 = vsel %vm1022, %v1167, 0
      %v1203 = vsel %vm1022, %v1168, 0
      %v1206 = vsel %vm1022, %v1169, 0
      %1208 = vmatpush.msra.mxu0 0.0
      %1209 = vmatpush.msra.mxu0 0.0
      %1210 = vmatpush.msra.mxu0 0.0
      %1211 = vmatpush.msra.mxu0 0.0
      %1212 = vmatpush.msra.mxu0 0.0
      %1213 = vmatpush.msra.mxu0 0.0
      %1214 = vmatpush.msra.mxu0 0.0
      %1215 = vmatpush.msra.mxu0 0.0
      %1216 = vmatpush.msra.mxu0 0.0
      %1217 = vmatpush.msra.mxu0 0.0
      %1218 = vmatpush.msra.mxu0 0.0
      %1219 = vmatpush.msra.mxu0 0.0
      %1220 = vmatpush.msra.mxu0 0.0
      %1221 = vmatpush.msra.mxu0 0.0
      %1222 = vmatpush.msra.mxu0 %v1194
      %1223 = vmatpush.msra.mxu0 %v1191
      %1224 = vmatmul.f32.gmra.mxu0 %v1197
      %v1225 = vpop.f32.mrf.mxu0
      %v1226 = vadd.f32 0.0, %v1225
      %1227 = vmatmul.f32.gmra.mxu0 %v1200
      %v1228 = vpop.f32.mrf.mxu0
      %v1229 = vadd.f32 0.0, %v1228
      %1230 = vmatmul.f32.gmra.mxu0 %v1203
      %v1231 = vpop.f32.mrf.mxu0
      %v1232 = vadd.f32 0.0, %v1231
      %1233 = vmatmul.f32.gmra.mxu0 %v1206
      %v1234 = vpop.f32.mrf.mxu0
      %v1235 = vadd.f32 0.0, %v1234
      %1236 = vdwg.mxu0
      %v1237 = vadd.f32 %v1154, %v1226
      %v1238 = vadd.f32 %v1157, %v1229
      %v1239 = vadd.f32 %v1160, %v1232
      %v1240 = vadd.f32 %v1163, %v1235
      %s1241 = scalar_lea.vmem %s6, 96
      %v1242 = vld [vmem:[%s1241] sm:$0xff]
      %v1243 = vld [vmem:[%s1241 + $0x8] sm:$0xff]
      %v1244 = vld [vmem:[%s1241 + $0x10] sm:$0xff]
      %v1245 = vld [vmem:[%s1241 + $0x18] sm:$0xff]
      %s1246 = scalar_lea.vmem %s7, 48
      %v1247 = vld [vmem:[%s1246] sm:$0xff]
      %v1248 = vld [vmem:[%s1246 + $0x8] sm:$0xff]
      %1249 = vmatpush.msra.mxu0 0.0
      %1250 = vmatpush.msra.mxu0 0.0
      %1251 = vmatpush.msra.mxu0 0.0
      %1252 = vmatpush.msra.mxu0 0.0
      %1253 = vmatpush.msra.mxu0 0.0
      %1254 = vmatpush.msra.mxu0 0.0
      %1255 = vmatpush.msra.mxu0 0.0
      %1256 = vmatpush.msra.mxu0 0.0
      %1257 = vmatpush.msra.mxu0 0.0
      %1258 = vmatpush.msra.mxu0 0.0
      %1259 = vmatpush.msra.mxu0 0.0
      %1260 = vmatpush.msra.mxu0 0.0
      %1261 = vmatpush.msra.mxu0 0.0
      %1262 = vmatpush.msra.mxu0 0.0
      %1263 = vmatpush.msra.mxu0 %v1248
      %1264 = vmatpush.msra.mxu0 %v1247
      %1265 = vmatmul.f32.gmra.mxu0 %v1024
      %v1266 = vpop.f32.mrf.mxu0
      %v1267 = vadd.f32 0.0, %v1266
      %1268 = vmatmul.f32.gmra.mxu0 %v1027
      %v1269 = vpop.f32.mrf.mxu0
      %v1270 = vadd.f32 0.0, %v1269
      %1271 = vdwg.mxu0
      %v1273 = vsel %vm1022, %v1242, 0
      %v1276 = vsel %vm1022, %v1243, 0
      %v1279 = vsel %vm1022, %v1244, 0
      %v1282 = vsel %vm1022, %v1245, 0
      %1284 = vmatpush.msra.mxu0 0.0
      %1285 = vmatpush.msra.mxu0 0.0
      %1286 = vmatpush.msra.mxu0 0.0
      %1287 = vmatpush.msra.mxu0 0.0
      %1288 = vmatpush.msra.mxu0 0.0
      %1289 = vmatpush.msra.mxu0 0.0
      %1290 = vmatpush.msra.mxu0 0.0
      %1291 = vmatpush.msra.mxu0 0.0
      %1292 = vmatpush.msra.mxu0 0.0
      %1293 = vmatpush.msra.mxu0 0.0
      %1294 = vmatpush.msra.mxu0 0.0
      %1295 = vmatpush.msra.mxu0 0.0
      %1296 = vmatpush.msra.mxu0 0.0
      %1297 = vmatpush.msra.mxu0 0.0
      %1298 = vmatpush.msra.mxu0 %v1270
      %1299 = vmatpush.msra.mxu0 %v1267
      %1300 = vmatmul.f32.gmra.mxu0 %v1273
      %v1301 = vpop.f32.mrf.mxu0
      %v1302 = vadd.f32 0.0, %v1301
      %1303 = vmatmul.f32.gmra.mxu0 %v1276
      %v1304 = vpop.f32.mrf.mxu0
      %v1305 = vadd.f32 0.0, %v1304
      %1306 = vmatmul.f32.gmra.mxu0 %v1279
      %v1307 = vpop.f32.mrf.mxu0
      %v1308 = vadd.f32 0.0, %v1307
      %1309 = vmatmul.f32.gmra.mxu0 %v1282
      %v1310 = vpop.f32.mrf.mxu0
      %v1311 = vadd.f32 0.0, %v1310
      %1312 = vdwg.mxu0
      %v1313 = vadd.f32 %v1237, %v1302
      %v1314 = vadd.f32 %v1238, %v1305
      %v1315 = vadd.f32 %v1239, %v1308
      %v1316 = vadd.f32 %v1240, %v1311
      %v1317 = vld [vmem:[%s8] sm:$0xff]
      %v1318 = vld [vmem:[%s8 + $0x8] sm:$0xff]
      %v1319 = vld [vmem:[%s8 + $0x10] sm:$0xff]
      %v1320 = vld [vmem:[%s8 + $0x18] sm:$0xff]
      %1322 = vset.pattern.permute.xlu0 0
      %1323 = vperm.xlu0 %1322, %v1317
      %v1324 = vpop.permute.xlu0 %1323
      %1327 = vset.pattern.permute.xlu0 0
      %1328 = vperm.xlu0 %1327, %v1318
      %v1329 = vpop.permute.xlu0 %1328
      %1332 = vset.pattern.permute.xlu0 0
      %1333 = vperm.xlu0 %1332, %v1319
      %v1334 = vpop.permute.xlu0 %1333
      %1337 = vset.pattern.permute.xlu0 0
      %1338 = vperm.xlu0 %1337, %v1320
      %v1339 = vpop.permute.xlu0 %1338
      %v1341 = vadd.f32 %v1313, %v1324
      %v1342 = vadd.f32 %v1314, %v1329
      %v1343 = vadd.f32 %v1315, %v1334
      %v1344 = vadd.f32 %v1316, %v1339
      %v1345 = vmax.f32 %v1341, 0.0
      %v1346 = vmax.f32 %v1342, 0.0
      %v1347 = vmax.f32 %v1343, 0.0
      %v1348 = vmax.f32 %v1344, 0.0
      %v1349 = vld [vmem:[%s9] sm:$0xff]
      %v1350 = vld [vmem:[%s9 + $0x8] sm:$0xff]
      %v1351 = vld [vmem:[%s9 + $0x10] sm:$0xff]
      %v1352 = vld [vmem:[%s9 + $0x18] sm:$0xff]
      %v1353 = vld [vmem:[%s9 + $0x20] sm:$0xff]
      %v1354 = vld [vmem:[%s9 + $0x28] sm:$0xff]
      %v1355 = vld [vmem:[%s9 + $0x30] sm:$0xff]
      %v1356 = vld [vmem:[%s9 + $0x38] sm:$0xff]
      %vm1357 = vcmask 261120
      %v1359 = vsel %vm1357, %v1349, 0
      %v1362 = vsel %vm1357, %v1350, 0
      %v1365 = vsel %vm1357, %v1351, 0
      %v1368 = vsel %vm1357, %v1352, 0
      %v1371 = vsel %vm1357, %v1353, 0
      %v1374 = vsel %vm1357, %v1354, 0
      %v1377 = vsel %vm1357, %v1355, 0
      %v1380 = vsel %vm1357, %v1356, 0
      %1382 = vmatpush.msra.mxu0 0.0
      %1383 = vmatpush.msra.mxu0 0.0
      %1384 = vmatpush.msra.mxu0 0.0
      %1385 = vmatpush.msra.mxu0 0.0
      %1386 = vmatpush.msra.mxu0 0.0
      %1387 = vmatpush.msra.mxu0 0.0
      %1388 = vmatpush.msra.mxu0 0.0
      %1389 = vmatpush.msra.mxu0 0.0
      %1390 = vmatpush.msra.mxu0 0.0
      %1391 = vmatpush.msra.mxu0 0.0
      %1392 = vmatpush.msra.mxu0 0.0
      %1393 = vmatpush.msra.mxu0 0.0
      %1394 = vmatpush.msra.mxu0 %v1348
      %1395 = vmatpush.msra.mxu0 %v1347
      %1396 = vmatpush.msra.mxu0 %v1346
      %1397 = vmatpush.msra.mxu0 %v1345
      %1398 = vmatmul.f32.gmra.mxu0 %v1359
      %v1399 = vpop.f32.mrf.mxu0
      %v1400 = vadd.f32 0.0, %v1399
      %1401 = vmatmul.f32.gmra.mxu0 %v1362
      %v1402 = vpop.f32.mrf.mxu0
      %v1403 = vadd.f32 0.0, %v1402
      %1404 = vmatmul.f32.gmra.mxu0 %v1365
      %v1405 = vpop.f32.mrf.mxu0
      %v1406 = vadd.f32 0.0, %v1405
      %1407 = vmatmul.f32.gmra.mxu0 %v1368
      %v1408 = vpop.f32.mrf.mxu0
      %v1409 = vadd.f32 0.0, %v1408
      %1410 = vmatmul.f32.gmra.mxu0 %v1371
      %v1411 = vpop.f32.mrf.mxu0
      %v1412 = vadd.f32 0.0, %v1411
      %1413 = vmatmul.f32.gmra.mxu0 %v1374
      %v1414 = vpop.f32.mrf.mxu0
      %v1415 = vadd.f32 0.0, %v1414
      %1416 = vmatmul.f32.gmra.mxu0 %v1377
      %v1417 = vpop.f32.mrf.mxu0
      %v1418 = vadd.f32 0.0, %v1417
      %1419 = vmatmul.f32.gmra.mxu0 %v1380
      %v1420 = vpop.f32.mrf.mxu0
      %v1421 = vadd.f32 0.0, %v1420
      %1422 = vdwg.mxu0
      %s1423 = scalar_lea.vmem %s9, 64
      %v1424 = vld [vmem:[%s1423] sm:$0xff]
      %v1425 = vld [vmem:[%s1423 + $0x8] sm:$0xff]
      %v1426 = vld [vmem:[%s1423 + $0x10] sm:$0xff]
      %v1427 = vld [vmem:[%s1423 + $0x18] sm:$0xff]
      %v1428 = vld [vmem:[%s1423 + $0x20] sm:$0xff]
      %v1429 = vld [vmem:[%s1423 + $0x28] sm:$0xff]
      %v1430 = vld [vmem:[%s1423 + $0x30] sm:$0xff]
      %v1431 = vld [vmem:[%s1423 + $0x38] sm:$0xff]
      %v1433 = vsel %vm1357, %v1424, 0
      %v1436 = vsel %vm1357, %v1425, 0
      %v1439 = vsel %vm1357, %v1426, 0
      %v1442 = vsel %vm1357, %v1427, 0
      %v1445 = vsel %vm1357, %v1428, 0
      %v1448 = vsel %vm1357, %v1429, 0
      %v1451 = vsel %vm1357, %v1430, 0
      %v1454 = vsel %vm1357, %v1431, 0
      %1456 = vmatpush.msra.mxu0 0.0
      %1457 = vmatpush.msra.mxu0 0.0
      %1458 = vmatpush.msra.mxu0 0.0
      %1459 = vmatpush.msra.mxu0 0.0
      %1460 = vmatpush.msra.mxu0 0.0
      %1461 = vmatpush.msra.mxu0 0.0
      %1462 = vmatpush.msra.mxu0 0.0
      %1463 = vmatpush.msra.mxu0 0.0
      %1464 = vmatpush.msra.mxu0 0.0
      %1465 = vmatpush.msra.mxu0 0.0
      %1466 = vmatpush.msra.mxu0 0.0
      %1467 = vmatpush.msra.mxu0 0.0
      %1468 = vmatpush.msra.mxu0 %v1348
      %1469 = vmatpush.msra.mxu0 %v1347
      %1470 = vmatpush.msra.mxu0 %v1346
      %1471 = vmatpush.msra.mxu0 %v1345
      %1472 = vmatmul.f32.gmra.mxu0 %v1433
      %v1473 = vpop.f32.mrf.mxu0
      %v1474 = vadd.f32 0.0, %v1473
      %1475 = vmatmul.f32.gmra.mxu0 %v1436
      %v1476 = vpop.f32.mrf.mxu0
      %v1477 = vadd.f32 0.0, %v1476
      %1478 = vmatmul.f32.gmra.mxu0 %v1439
      %v1479 = vpop.f32.mrf.mxu0
      %v1480 = vadd.f32 0.0, %v1479
      %1481 = vmatmul.f32.gmra.mxu0 %v1442
      %v1482 = vpop.f32.mrf.mxu0
      %v1483 = vadd.f32 0.0, %v1482
      %1484 = vmatmul.f32.gmra.mxu0 %v1445
      %v1485 = vpop.f32.mrf.mxu0
      %v1486 = vadd.f32 0.0, %v1485
      %1487 = vmatmul.f32.gmra.mxu0 %v1448
      %v1488 = vpop.f32.mrf.mxu0
      %v1489 = vadd.f32 0.0, %v1488
      %1490 = vmatmul.f32.gmra.mxu0 %v1451
      %v1491 = vpop.f32.mrf.mxu0
      %v1492 = vadd.f32 0.0, %v1491
      %1493 = vmatmul.f32.gmra.mxu0 %v1454
      %v1494 = vpop.f32.mrf.mxu0
      %v1495 = vadd.f32 0.0, %v1494
      %1496 = vdwg.mxu0
      %1505 = vrot.lane.b32.xlu0 %v1474, 127
      %v1506 = vpop.permute.xlu0 %1505
      %1507 = vrot.lane.b32.xlu0 %v1477, 127
      %v1508 = vpop.permute.xlu0 %1507
      %1509 = vrot.lane.b32.xlu0 %v1480, 127
      %v1510 = vpop.permute.xlu0 %1509
      %1511 = vrot.lane.b32.xlu0 %v1483, 127
      %v1512 = vpop.permute.xlu0 %1511
      %1513 = vrot.lane.b32.xlu0 %v1486, 127
      %v1514 = vpop.permute.xlu0 %1513
      %1515 = vrot.lane.b32.xlu0 %v1489, 127
      %v1516 = vpop.permute.xlu0 %1515
      %1517 = vrot.lane.b32.xlu0 %v1492, 127
      %v1518 = vpop.permute.xlu0 %1517
      %1519 = vrot.lane.b32.xlu0 %v1495, 127
      %v1520 = vpop.permute.xlu0 %1519
      %v1529 = vadd.f32 %v1400, %v1506
      %v1530 = vadd.f32 %v1403, %v1508
      %v1531 = vadd.f32 %v1406, %v1510
      %v1532 = vadd.f32 %v1409, %v1512
      %v1533 = vadd.f32 %v1412, %v1514
      %v1534 = vadd.f32 %v1415, %v1516
      %v1535 = vadd.f32 %v1418, %v1518
      %v1536 = vadd.f32 %v1421, %v1520
      %s1537 = scalar_lea.vmem %s9, 128
      %v1538 = vld [vmem:[%s1537] sm:$0xff]
      %v1539 = vld [vmem:[%s1537 + $0x8] sm:$0xff]
      %v1540 = vld [vmem:[%s1537 + $0x10] sm:$0xff]
      %v1541 = vld [vmem:[%s1537 + $0x18] sm:$0xff]
      %v1542 = vld [vmem:[%s1537 + $0x20] sm:$0xff]
      %v1543 = vld [vmem:[%s1537 + $0x28] sm:$0xff]
      %v1544 = vld [vmem:[%s1537 + $0x30] sm:$0xff]
      %v1545 = vld [vmem:[%s1537 + $0x38] sm:$0xff]
      %v1547 = vsel %vm1357, %v1538, 0
      %v1550 = vsel %vm1357, %v1539, 0
      %v1553 = vsel %vm1357, %v1540, 0
      %v1556 = vsel %vm1357, %v1541, 0
      %v1559 = vsel %vm1357, %v1542, 0
      %v1562 = vsel %vm1357, %v1543, 0
      %v1565 = vsel %vm1357, %v1544, 0
      %v1568 = vsel %vm1357, %v1545, 0
      %1570 = vmatpush.msra.mxu0 0.0
      %1571 = vmatpush.msra.mxu0 0.0
      %1572 = vmatpush.msra.mxu0 0.0
      %1573 = vmatpush.msra.mxu0 0.0
      %1574 = vmatpush.msra.mxu0 0.0
      %1575 = vmatpush.msra.mxu0 0.0
      %1576 = vmatpush.msra.mxu0 0.0
      %1577 = vmatpush.msra.mxu0 0.0
      %1578 = vmatpush.msra.mxu0 0.0
      %1579 = vmatpush.msra.mxu0 0.0
      %1580 = vmatpush.msra.mxu0 0.0
      %1581 = vmatpush.msra.mxu0 0.0
      %1582 = vmatpush.msra.mxu0 %v1348
      %1583 = vmatpush.msra.mxu0 %v1347
      %1584 = vmatpush.msra.mxu0 %v1346
      %1585 = vmatpush.msra.mxu0 %v1345
      %1586 = vmatmul.f32.gmra.mxu0 %v1547
      %v1587 = vpop.f32.mrf.mxu0
      %v1588 = vadd.f32 0.0, %v1587
      %1589 = vmatmul.f32.gmra.mxu0 %v1550
      %v1590 = vpop.f32.mrf.mxu0
      %v1591 = vadd.f32 0.0, %v1590
      %1592 = vmatmul.f32.gmra.mxu0 %v1553
      %v1593 = vpop.f32.mrf.mxu0
      %v1594 = vadd.f32 0.0, %v1593
      %1595 = vmatmul.f32.gmra.mxu0 %v1556
      %v1596 = vpop.f32.mrf.mxu0
      %v1597 = vadd.f32 0.0, %v1596
      %1598 = vmatmul.f32.gmra.mxu0 %v1559
      %v1599 = vpop.f32.mrf.mxu0
      %v1600 = vadd.f32 0.0, %v1599
      %1601 = vmatmul.f32.gmra.mxu0 %v1562
      %v1602 = vpop.f32.mrf.mxu0
      %v1603 = vadd.f32 0.0, %v1602
      %1604 = vmatmul.f32.gmra.mxu0 %v1565
      %v1605 = vpop.f32.mrf.mxu0
      %v1606 = vadd.f32 0.0, %v1605
      %1607 = vmatmul.f32.gmra.mxu0 %v1568
      %v1608 = vpop.f32.mrf.mxu0
      %v1609 = vadd.f32 0.0, %v1608
      %1610 = vdwg.mxu0
      %1619 = vrot.lane.b32.xlu0 %v1588, 126
      %v1620 = vpop.permute.xlu0 %1619
      %1621 = vrot.lane.b32.xlu0 %v1591, 126
      %v1622 = vpop.permute.xlu0 %1621
      %1623 = vrot.lane.b32.xlu0 %v1594, 126
      %v1624 = vpop.permute.xlu0 %1623
      %1625 = vrot.lane.b32.xlu0 %v1597, 126
      %v1626 = vpop.permute.xlu0 %1625
      %1627 = vrot.lane.b32.xlu0 %v1600, 126
      %v1628 = vpop.permute.xlu0 %1627
      %1629 = vrot.lane.b32.xlu0 %v1603, 126
      %v1630 = vpop.permute.xlu0 %1629
      %1631 = vrot.lane.b32.xlu0 %v1606, 126
      %v1632 = vpop.permute.xlu0 %1631
      %1633 = vrot.lane.b32.xlu0 %v1609, 126
      %v1634 = vpop.permute.xlu0 %1633
      %v1643 = vadd.f32 %v1529, %v1620
      %v1644 = vadd.f32 %v1530, %v1622
      %v1645 = vadd.f32 %v1531, %v1624
      %v1646 = vadd.f32 %v1532, %v1626
      %v1647 = vadd.f32 %v1533, %v1628
      %v1648 = vadd.f32 %v1534, %v1630
      %v1649 = vadd.f32 %v1535, %v1632
      %v1650 = vadd.f32 %v1536, %v1634
      %s1651 = scalar_lea.vmem %s9, 192
      %v1652 = vld [vmem:[%s1651] sm:$0xff]
      %v1653 = vld [vmem:[%s1651 + $0x8] sm:$0xff]
      %v1654 = vld [vmem:[%s1651 + $0x10] sm:$0xff]
      %v1655 = vld [vmem:[%s1651 + $0x18] sm:$0xff]
      %v1656 = vld [vmem:[%s1651 + $0x20] sm:$0xff]
      %v1657 = vld [vmem:[%s1651 + $0x28] sm:$0xff]
      %v1658 = vld [vmem:[%s1651 + $0x30] sm:$0xff]
      %v1659 = vld [vmem:[%s1651 + $0x38] sm:$0xff]
      %v1661 = vsel %vm1357, %v1652, 0
      %v1664 = vsel %vm1357, %v1653, 0
      %v1667 = vsel %vm1357, %v1654, 0
      %v1670 = vsel %vm1357, %v1655, 0
      %v1673 = vsel %vm1357, %v1656, 0
      %v1676 = vsel %vm1357, %v1657, 0
      %v1679 = vsel %vm1357, %v1658, 0
      %v1682 = vsel %vm1357, %v1659, 0
      %1684 = vmatpush.msra.mxu0 0.0
      %1685 = vmatpush.msra.mxu0 0.0
      %1686 = vmatpush.msra.mxu0 0.0
      %1687 = vmatpush.msra.mxu0 0.0
      %1688 = vmatpush.msra.mxu0 0.0
      %1689 = vmatpush.msra.mxu0 0.0
      %1690 = vmatpush.msra.mxu0 0.0
      %1691 = vmatpush.msra.mxu0 0.0
      %1692 = vmatpush.msra.mxu0 0.0
      %1693 = vmatpush.msra.mxu0 0.0
      %1694 = vmatpush.msra.mxu0 0.0
      %1695 = vmatpush.msra.mxu0 0.0
      %1696 = vmatpush.msra.mxu0 %v1348
      %1697 = vmatpush.msra.mxu0 %v1347
      %1698 = vmatpush.msra.mxu0 %v1346
      %1699 = vmatpush.msra.mxu0 %v1345
      %1700 = vmatmul.f32.gmra.mxu0 %v1661
      %v1701 = vpop.f32.mrf.mxu0
      %v1702 = vadd.f32 0.0, %v1701
      %1703 = vmatmul.f32.gmra.mxu0 %v1664
      %v1704 = vpop.f32.mrf.mxu0
      %v1705 = vadd.f32 0.0, %v1704
      %1706 = vmatmul.f32.gmra.mxu0 %v1667
      %v1707 = vpop.f32.mrf.mxu0
      %v1708 = vadd.f32 0.0, %v1707
      %1709 = vmatmul.f32.gmra.mxu0 %v1670
      %v1710 = vpop.f32.mrf.mxu0
      %v1711 = vadd.f32 0.0, %v1710
      %1712 = vmatmul.f32.gmra.mxu0 %v1673
      %v1713 = vpop.f32.mrf.mxu0
      %v1714 = vadd.f32 0.0, %v1713
      %1715 = vmatmul.f32.gmra.mxu0 %v1676
      %v1716 = vpop.f32.mrf.mxu0
      %v1717 = vadd.f32 0.0, %v1716
      %1718 = vmatmul.f32.gmra.mxu0 %v1679
      %v1719 = vpop.f32.mrf.mxu0
      %v1720 = vadd.f32 0.0, %v1719
      %1721 = vmatmul.f32.gmra.mxu0 %v1682
      %v1722 = vpop.f32.mrf.mxu0
      %v1723 = vadd.f32 0.0, %v1722
      %1724 = vdwg.mxu0
      %1733 = vrot.lane.b32.xlu0 %v1702, 125
      %v1734 = vpop.permute.xlu0 %1733
      %1735 = vrot.lane.b32.xlu0 %v1705, 125
      %v1736 = vpop.permute.xlu0 %1735
      %1737 = vrot.lane.b32.xlu0 %v1708, 125
      %v1738 = vpop.permute.xlu0 %1737
      %1739 = vrot.lane.b32.xlu0 %v1711, 125
      %v1740 = vpop.permute.xlu0 %1739
      %1741 = vrot.lane.b32.xlu0 %v1714, 125
      %v1742 = vpop.permute.xlu0 %1741
      %1743 = vrot.lane.b32.xlu0 %v1717, 125
      %v1744 = vpop.permute.xlu0 %1743
      %1745 = vrot.lane.b32.xlu0 %v1720, 125
      %v1746 = vpop.permute.xlu0 %1745
      %1747 = vrot.lane.b32.xlu0 %v1723, 125
      %v1748 = vpop.permute.xlu0 %1747
      %v1757 = vadd.f32 %v1643, %v1734
      %v1758 = vadd.f32 %v1644, %v1736
      %v1759 = vadd.f32 %v1645, %v1738
      %v1760 = vadd.f32 %v1646, %v1740
      %v1761 = vadd.f32 %v1647, %v1742
      %v1762 = vadd.f32 %v1648, %v1744
      %v1763 = vadd.f32 %v1649, %v1746
      %v1764 = vadd.f32 %v1650, %v1748
      %v1765 = vld [vmem:[%s11] sm:$0xff]
      %v1766 = vld [vmem:[%s11 + $0x8] sm:$0xff]
      %v1767 = vld [vmem:[%s11 + $0x10] sm:$0xff]
      %v1768 = vld [vmem:[%s11 + $0x18] sm:$0xff]
      %v1769 = vld [vmem:[%s11 + $0x20] sm:$0xff]
      %v1770 = vld [vmem:[%s11 + $0x28] sm:$0xff]
      %v1771 = vld [vmem:[%s11 + $0x30] sm:$0xff]
      %v1772 = vld [vmem:[%s11 + $0x38] sm:$0xff]
      %v1773 = vadd.f32 %v1757, %v1765
      %v1774 = vadd.f32 %v1758, %v1766
      %v1775 = vadd.f32 %v1759, %v1767
      %v1776 = vadd.f32 %v1760, %v1768
      %v1777 = vadd.f32 %v1761, %v1769
      %v1778 = vadd.f32 %v1762, %v1770
      %v1779 = vadd.f32 %v1763, %v1771
      %v1780 = vadd.f32 %v1764, %v1772
      %v1781 = vmax.f32 %v1773, 0.0
      %v1782 = vmax.f32 %v1774, 0.0
      %v1783 = vmax.f32 %v1775, 0.0
      %v1784 = vmax.f32 %v1776, 0.0
      %v1785 = vmax.f32 %v1777, 0.0
      %v1786 = vmax.f32 %v1778, 0.0
      %v1787 = vmax.f32 %v1779, 0.0
      %v1788 = vmax.f32 %v1780, 0.0
      %v1789 = vld [vmem:[%s12] sm:$0xff]
      %v1790 = vld [vmem:[%s12 + $0x8] sm:$0xff]
      %v1791 = vld [vmem:[%s12 + $0x10] sm:$0xff]
      %v1792 = vld [vmem:[%s12 + $0x18] sm:$0xff]
      %v1793 = vld [vmem:[%s13] sm:$0xff]
      %v1794 = vld [vmem:[%s13 + $0x8] sm:$0xff]
      %v1795 = vld [vmem:[%s13 + $0x10] sm:$0xff]
      %v1796 = vld [vmem:[%s13 + $0x18] sm:$0xff]
      %v1798 = vsel %vm1022, %v1793, 0
      %v1801 = vsel %vm1022, %v1794, 0
      %v1804 = vsel %vm1022, %v1795, 0
      %v1807 = vsel %vm1022, %v1796, 0
      %1809 = vmatpush.msra.mxu0 0.0
      %1810 = vmatpush.msra.mxu0 0.0
      %1811 = vmatpush.msra.mxu0 0.0
      %1812 = vmatpush.msra.mxu0 0.0
      %1813 = vmatpush.msra.mxu0 0.0
      %1814 = vmatpush.msra.mxu0 0.0
      %1815 = vmatpush.msra.mxu0 0.0
      %1816 = vmatpush.msra.mxu0 0.0
      %1817 = vmatpush.msra.mxu0 0.0
      %1818 = vmatpush.msra.mxu0 0.0
      %1819 = vmatpush.msra.mxu0 0.0
      %1820 = vmatpush.msra.mxu0 0.0
      %1821 = vmatpush.msra.mxu0 0.0
      %1822 = vmatpush.msra.mxu0 0.0
      %1823 = vmatpush.msra.mxu0 %v1015
      %1824 = vmatpush.msra.mxu0 %v1014
      %1825 = vmatmul.f32.gmra.mxu0 %v1798
      %v1826 = vpop.f32.mrf.mxu0
      %v1827 = vadd.f32 0.0, %v1826
      %1828 = vmatmul.f32.gmra.mxu0 %v1801
      %v1829 = vpop.f32.mrf.mxu0
      %v1830 = vadd.f32 0.0, %v1829
      %1831 = vmatmul.f32.gmra.mxu0 %v1804
      %v1832 = vpop.f32.mrf.mxu0
      %v1833 = vadd.f32 0.0, %v1832
      %1834 = vmatmul.f32.gmra.mxu0 %v1807
      %v1835 = vpop.f32.mrf.mxu0
      %v1836 = vadd.f32 0.0, %v1835
      %1837 = vdwg.mxu0
      %v1838 = vld [vmem:[%s17] sm:$0xff]
      %v1839 = vld [vmem:[%s17 + $0x8] sm:$0xff]
      %v1841 = vsel %vm1022, %v1827, 0
      %v1844 = vsel %vm1022, %v1830, 0
      %v1847 = vsel %vm1022, %v1833, 0
      %v1850 = vsel %vm1022, %v1836, 0
      %1852 = vmatpush.msra.mxu0 0.0
      %1853 = vmatpush.msra.mxu0 0.0
      %1854 = vmatpush.msra.mxu0 0.0
      %1855 = vmatpush.msra.mxu0 0.0
      %1856 = vmatpush.msra.mxu0 0.0
      %1857 = vmatpush.msra.mxu0 0.0
      %1858 = vmatpush.msra.mxu0 0.0
      %1859 = vmatpush.msra.mxu0 0.0
      %1860 = vmatpush.msra.mxu0 0.0
      %1861 = vmatpush.msra.mxu0 0.0
      %1862 = vmatpush.msra.mxu0 0.0
      %1863 = vmatpush.msra.mxu0 0.0
      %1864 = vmatpush.msra.mxu0 0.0
      %1865 = vmatpush.msra.mxu0 0.0
      %1866 = vmatpush.msra.mxu0 %v1839
      %1867 = vmatpush.msra.mxu0 %v1838
      %1868 = vmatmul.f32.gmra.mxu0 %v1841
      %v1869 = vpop.f32.mrf.mxu0
      %v1870 = vadd.f32 0.0, %v1869
      %1871 = vmatmul.f32.gmra.mxu0 %v1844
      %v1872 = vpop.f32.mrf.mxu0
      %v1873 = vadd.f32 0.0, %v1872
      %1874 = vmatmul.f32.gmra.mxu0 %v1847
      %v1875 = vpop.f32.mrf.mxu0
      %v1876 = vadd.f32 0.0, %v1875
      %1877 = vmatmul.f32.gmra.mxu0 %v1850
      %v1878 = vpop.f32.mrf.mxu0
      %v1879 = vadd.f32 0.0, %v1878
      %1880 = vdwg.mxu0
      %v1882 = vsel %vm815, %v1789, 0
      %v1885 = vsel %vm815, %v1790, 0
      %v1888 = vsel %vm815, %v1791, 0
      %v1891 = vsel %vm815, %v1792, 0
      %1893 = vmatpush.msra.mxu0 0.0
      %1894 = vmatpush.msra.mxu0 0.0
      %1895 = vmatpush.msra.mxu0 0.0
      %1896 = vmatpush.msra.mxu0 0.0
      %1897 = vmatpush.msra.mxu0 0.0
      %1898 = vmatpush.msra.mxu0 0.0
      %1899 = vmatpush.msra.mxu0 0.0
      %1900 = vmatpush.msra.mxu0 0.0
      %1901 = vmatpush.msra.mxu0 0.0
      %1902 = vmatpush.msra.mxu0 0.0
      %1903 = vmatpush.msra.mxu0 0.0
      %1904 = vmatpush.msra.mxu0 0.0
      %1905 = vmatpush.msra.mxu0 0.0
      %1906 = vmatpush.msra.mxu0 0.0
      %1907 = vmatpush.msra.mxu0 0.0
      %1908 = vmatpush.msra.mxu0 %v748
      %1909 = vmatmul.f32.gmra.mxu0 %v1882
      %v1910 = vpop.f32.mrf.mxu0
      %v1911 = vadd.f32 %v1870, %v1910
      %1912 = vmatmul.f32.gmra.mxu0 %v1885
      %v1913 = vpop.f32.mrf.mxu0
      %v1914 = vadd.f32 %v1873, %v1913
      %1915 = vmatmul.f32.gmra.mxu0 %v1888
      %v1916 = vpop.f32.mrf.mxu0
      %v1917 = vadd.f32 %v1876, %v1916
      %1918 = vmatmul.f32.gmra.mxu0 %v1891
      %v1919 = vpop.f32.mrf.mxu0
      %v1920 = vadd.f32 %v1879, %v1919
      %1921 = vdwg.mxu0
      %v1922 = vld [vmem:[%s14] sm:$0xff]
      %v1923 = vld [vmem:[%s14 + $0x8] sm:$0xff]
      %v1924 = vld [vmem:[%s14 + $0x10] sm:$0xff]
      %v1925 = vld [vmem:[%s14 + $0x18] sm:$0xff]
      %v1927 = vsel %vm1357, %v1922, 0
      %v1930 = vsel %vm1357, %v1923, 0
      %v1933 = vsel %vm1357, %v1924, 0
      %v1936 = vsel %vm1357, %v1925, 0
      %1938 = vmatpush.msra.mxu0 0.0
      %1939 = vmatpush.msra.mxu0 0.0
      %1940 = vmatpush.msra.mxu0 0.0
      %1941 = vmatpush.msra.mxu0 0.0
      %1942 = vmatpush.msra.mxu0 0.0
      %1943 = vmatpush.msra.mxu0 0.0
      %1944 = vmatpush.msra.mxu0 0.0
      %1945 = vmatpush.msra.mxu0 0.0
      %1946 = vmatpush.msra.mxu0 0.0
      %1947 = vmatpush.msra.mxu0 0.0
      %1948 = vmatpush.msra.mxu0 0.0
      %1949 = vmatpush.msra.mxu0 0.0
      %1950 = vmatpush.msra.mxu0 %v1348
      %1951 = vmatpush.msra.mxu0 %v1347
      %1952 = vmatpush.msra.mxu0 %v1346
      %1953 = vmatpush.msra.mxu0 %v1345
      %1954 = vmatmul.f32.gmra.mxu0 %v1927
      %v1955 = vpop.f32.mrf.mxu0
      %v1956 = vadd.f32 0.0, %v1955
      %1957 = vmatmul.f32.gmra.mxu0 %v1930
      %v1958 = vpop.f32.mrf.mxu0
      %v1959 = vadd.f32 0.0, %v1958
      %1960 = vmatmul.f32.gmra.mxu0 %v1933
      %v1961 = vpop.f32.mrf.mxu0
      %v1962 = vadd.f32 0.0, %v1961
      %1963 = vmatmul.f32.gmra.mxu0 %v1936
      %v1964 = vpop.f32.mrf.mxu0
      %v1965 = vadd.f32 0.0, %v1964
      %1966 = vdwg.mxu0
      %v1967 = vld [vmem:[%s18] sm:$0xf]
      %vm1968 = vcmask 31744
      %v1970 = vsel %vm1968, %v1956, 0
      %v1973 = vsel %vm1968, %v1959, 0
      %v1976 = vsel %vm1968, %v1962, 0
      %v1979 = vsel %vm1968, %v1965, 0
      %vm1981 = vcmask 1043456
      %v1983 = vsel %vm1981, %v1967, 0
      %1985 = vmatpush.msra.mxu0 0.0
      %1986 = vmatpush.msra.mxu0 0.0
      %1987 = vmatpush.msra.mxu0 0.0
      %1988 = vmatpush.msra.mxu0 0.0
      %1989 = vmatpush.msra.mxu0 0.0
      %1990 = vmatpush.msra.mxu0 0.0
      %1991 = vmatpush.msra.mxu0 0.0
      %1992 = vmatpush.msra.mxu0 0.0
      %1993 = vmatpush.msra.mxu0 0.0
      %1994 = vmatpush.msra.mxu0 0.0
      %1995 = vmatpush.msra.mxu0 0.0
      %1996 = vmatpush.msra.mxu0 0.0
      %1997 = vmatpush.msra.mxu0 0.0
      %1998 = vmatpush.msra.mxu0 0.0
      %1999 = vmatpush.msra.mxu0 0.0
      %2000 = vmatpush.msra.mxu0 %v1983
      %2001 = vmatmul.f32.gmra.mxu0 %v1970
      %v2002 = vpop.f32.mrf.mxu0
      %v2003 = vadd.f32 0.0, %v2002
      %2004 = vmatmul.f32.gmra.mxu0 %v1973
      %v2005 = vpop.f32.mrf.mxu0
      %v2006 = vadd.f32 0.0, %v2005
      %2007 = vmatmul.f32.gmra.mxu0 %v1976
      %v2008 = vpop.f32.mrf.mxu0
      %v2009 = vadd.f32 0.0, %v2008
      %2010 = vmatmul.f32.gmra.mxu0 %v1979
      %v2011 = vpop.f32.mrf.mxu0
      %v2012 = vadd.f32 0.0, %v2011
      %2013 = vdwg.mxu0
      %v2014 = vadd.f32 %v1911, %v2003
      %v2015 = vadd.f32 %v1914, %v2006
      %v2016 = vadd.f32 %v1917, %v2009
      %v2017 = vadd.f32 %v1920, %v2012
      %v2018 = vld [vmem:[%s15] sm:$0xff]
      %v2019 = vld [vmem:[%s15 + $0x8] sm:$0xff]
      %v2020 = vld [vmem:[%s15 + $0x10] sm:$0xff]
      %v2021 = vld [vmem:[%s15 + $0x18] sm:$0xff]
      %v2022 = vld [vmem:[%s19] sm:$0x1]
      %2024 = vset.pattern.permute.xlu0 0
      %2025 = vperm.xlu0 %2024, %v1781
      %v2026 = vpop.permute.xlu0 %2025
      %2029 = vset.pattern.permute.xlu0 0
      %2030 = vperm.xlu0 %2029, %v1782
      %v2031 = vpop.permute.xlu0 %2030
      %2034 = vset.pattern.permute.xlu0 0
      %2035 = vperm.xlu0 %2034, %v1783
      %v2036 = vpop.permute.xlu0 %2035
      %2039 = vset.pattern.permute.xlu0 0
      %2040 = vperm.xlu0 %2039, %v1784
      %v2041 = vpop.permute.xlu0 %2040
      %2044 = vset.pattern.permute.xlu0 0
      %2045 = vperm.xlu0 %2044, %v1785
      %v2046 = vpop.permute.xlu0 %2045
      %2049 = vset.pattern.permute.xlu0 0
      %2050 = vperm.xlu0 %2049, %v1786
      %v2051 = vpop.permute.xlu0 %2050
      %2054 = vset.pattern.permute.xlu0 0
      %2055 = vperm.xlu0 %2054, %v1787
      %v2056 = vpop.permute.xlu0 %2055
      %2059 = vset.pattern.permute.xlu0 0
      %2060 = vperm.xlu0 %2059, %v1788
      %v2061 = vpop.permute.xlu0 %2060
      %v2064 = vperm.slane %v2022, 0
      %v2066 = vmul.f32 %v2026, %v2064
      %v2067 = vmul.f32 %v2031, %v2064
      %v2068 = vmul.f32 %v2036, %v2064
      %v2069 = vmul.f32 %v2041, %v2064
      %v2070 = vmul.f32 %v2046, %v2064
      %v2071 = vmul.f32 %v2051, %v2064
      %v2072 = vmul.f32 %v2056, %v2064
      %v2073 = vmul.f32 %v2061, %v2064
      %v2075 = vsel %vm759, %v2018, 0
      %v2078 = vsel %vm759, %v2019, 0
      %v2081 = vsel %vm759, %v2020, 0
      %v2084 = vsel %vm759, %v2021, 0
      %2086 = vmatpush.msra.mxu0 0.0
      %2087 = vmatpush.msra.mxu0 0.0
      %2088 = vmatpush.msra.mxu0 0.0
      %2089 = vmatpush.msra.mxu0 0.0
      %2090 = vmatpush.msra.mxu0 0.0
      %2091 = vmatpush.msra.mxu0 0.0
      %2092 = vmatpush.msra.mxu0 0.0
      %2093 = vmatpush.msra.mxu0 0.0
      %2094 = vmatpush.msra.mxu0 %v2073
      %2095 = vmatpush.msra.mxu0 %v2072
      %2096 = vmatpush.msra.mxu0 %v2071
      %2097 = vmatpush.msra.mxu0 %v2070
      %2098 = vmatpush.msra.mxu0 %v2069
      %2099 = vmatpush.msra.mxu0 %v2068
      %2100 = vmatpush.msra.mxu0 %v2067
      %2101 = vmatpush.msra.mxu0 %v2066
      %2102 = vmatmul.f32.gmra.mxu0 %v2075
      %v2103 = vpop.f32.mrf.mxu0
      %v2104 = vadd.f32 0.0, %v2103
      %2105 = vmatmul.f32.gmra.mxu0 %v2078
      %v2106 = vpop.f32.mrf.mxu0
      %v2107 = vadd.f32 0.0, %v2106
      %2108 = vmatmul.f32.gmra.mxu0 %v2081
      %v2109 = vpop.f32.mrf.mxu0
      %v2110 = vadd.f32 0.0, %v2109
      %2111 = vmatmul.f32.gmra.mxu0 %v2084
      %v2112 = vpop.f32.mrf.mxu0
      %v2113 = vadd.f32 0.0, %v2112
      %2114 = vdwg.mxu0
      %v2115 = vadd.f32 %v2014, %v2104
      %v2116 = vadd.f32 %v2015, %v2107
      %v2117 = vadd.f32 %v2016, %v2110
      %v2118 = vadd.f32 %v2017, %v2113
      %v2119 = vld [vmem:[%s16] sm:$0xff]
      %v2120 = vld [vmem:[%s16 + $0x8] sm:$0xff]
      %v2121 = vld [vmem:[%s16 + $0x10] sm:$0xff]
      %v2122 = vld [vmem:[%s16 + $0x18] sm:$0xff]
      %2124 = vset.pattern.permute.xlu0 0
      %2125 = vperm.xlu0 %2124, %v2119
      %v2126 = vpop.permute.xlu0 %2125
      %2129 = vset.pattern.permute.xlu0 0
      %2130 = vperm.xlu0 %2129, %v2120
      %v2131 = vpop.permute.xlu0 %2130
      %2134 = vset.pattern.permute.xlu0 0
      %2135 = vperm.xlu0 %2134, %v2121
      %v2136 = vpop.permute.xlu0 %2135
      %2139 = vset.pattern.permute.xlu0 0
      %2140 = vperm.xlu0 %2139, %v2122
      %v2141 = vpop.permute.xlu0 %2140
      %v2143 = vadd.f32 %v2115, %v2126
      %v2144 = vadd.f32 %v2116, %v2131
      %v2145 = vadd.f32 %v2117, %v2136
      %v2146 = vadd.f32 %v2118, %v2141
      %v2147 = vmax.f32 %v2143, 0.0
      %v2148 = vmax.f32 %v2144, 0.0
      %v2149 = vmax.f32 %v2145, 0.0
      %v2150 = vmax.f32 %v2146, 0.0
      %v2151 = vld [vmem:[%s20] sm:$0x1f]
      %v2152 = vld [vmem:[%s21] sm:$0x1f]
      %2154 = vset.pattern.permute.xlu0 0
      %2155 = vperm.xlu0 %2154, %v2152
      %v2156 = vpop.permute.xlu0 %2155
      %v2159 = vsel %vm1357, %v2151, 0
      %2161 = vmatpush.msra.mxu0 0.0
      %2162 = vmatpush.msra.mxu0 0.0
      %2163 = vmatpush.msra.mxu0 0.0
      %2164 = vmatpush.msra.mxu0 0.0
      %2165 = vmatpush.msra.mxu0 0.0
      %2166 = vmatpush.msra.mxu0 0.0
      %2167 = vmatpush.msra.mxu0 0.0
      %2168 = vmatpush.msra.mxu0 0.0
      %2169 = vmatpush.msra.mxu0 0.0
      %2170 = vmatpush.msra.mxu0 0.0
      %2171 = vmatpush.msra.mxu0 0.0
      %2172 = vmatpush.msra.mxu0 0.0
      %2173 = vmatpush.msra.mxu0 %v2150
      %2174 = vmatpush.msra.mxu0 %v2149
      %2175 = vmatpush.msra.mxu0 %v2148
      %2176 = vmatpush.msra.mxu0 %v2147
      %2177 = vmatmul.f32.gmra.mxu0 %v2159
      %v2178 = vpop.f32.mrf.mxu0
      %v2179 = vadd.f32 %v2156, %v2178
      %2180 = vdwg.mxu0
      %v2181 = vld [vmem:[%s22] sm:$0xff]
      %v2182 = vld [vmem:[%s22 + $0x8] sm:$0xff]
      %v2183 = vld [vmem:[%s22 + $0x10] sm:$0xff]
      %v2184 = vld [vmem:[%s22 + $0x18] sm:$0xff]
      %v2185 = vld [vmem:[%s22 + $0x20] sm:$0xff]
      %v2186 = vld [vmem:[%s22 + $0x28] sm:$0xff]
      %v2187 = vld [vmem:[%s22 + $0x30] sm:$0xff]
      %v2188 = vld [vmem:[%s22 + $0x38] sm:$0xff]
      %v2189 = vld [vmem:[%s22 + $0x40] sm:$0xff]
      %v2190 = vld [vmem:[%s22 + $0x48] sm:$0xff]
      %v2191 = vld [vmem:[%s22 + $0x50] sm:$0xff]
      %v2192 = vld [vmem:[%s22 + $0x58] sm:$0xff]
      %v2193 = vld [vmem:[%s22 + $0x60] sm:$0xff]
      %v2194 = vld [vmem:[%s22 + $0x68] sm:$0xff]
      %v2195 = vld [vmem:[%s22 + $0x70] sm:$0xff]
      %v2196 = vld [vmem:[%s22 + $0x78] sm:$0xff]
      %v2197 = vld [vmem:[%s22 + $0x80] sm:$0xff]
      %v2198 = vld [vmem:[%s22 + $0x88] sm:$0xff]
      %v2199 = vld [vmem:[%s22 + $0x90] sm:$0xff]
      %v2200 = vld [vmem:[%s22 + $0x98] sm:$0xff]
      %v2201 = vld [vmem:[%s22 + $0xa0] sm:$0xff]
      %v2202 = vld [vmem:[%s22 + $0xa8] sm:$0xff]
      %v2203 = vld [vmem:[%s22 + $0xb0] sm:$0xff]
      %v2204 = vld [vmem:[%s22 + $0xb8] sm:$0xff]
      %v2205 = vld [vmem:[%s22 + $0xc0] sm:$0xff]
      %v2206 = vld [vmem:[%s22 + $0xc8] sm:$0xff]
      %v2207 = vld [vmem:[%s22 + $0xd0] sm:$0xff]
      %v2208 = vld [vmem:[%s22 + $0xd8] sm:$0xff]
      %v2209 = vld [vmem:[%s22 + $0xe0] sm:$0xff]
      %v2210 = vld [vmem:[%s22 + $0xe8] sm:$0xff]
      %v2211 = vld [vmem:[%s22 + $0xf0] sm:$0xff]
      %v2212 = vld [vmem:[%s22 + $0xf8] sm:$0xff]
      %v2213 = vld [vmem:[%s22 + $0x100] sm:$0xff]
      %v2214 = vld [vmem:[%s22 + $0x108] sm:$0xff]
      %v2215 = vld [vmem:[%s22 + $0x110] sm:$0xff]
      %v2216 = vld [vmem:[%s22 + $0x118] sm:$0xff]
      %v2217 = vld [vmem:[%s22 + $0x120] sm:$0xff]
      %v2218 = vld [vmem:[%s22 + $0x128] sm:$0xff]
      %v2219 = vld [vmem:[%s22 + $0x130] sm:$0xff]
      %v2220 = vld [vmem:[%s22 + $0x138] sm:$0xff]
      %v2221 = vld [vmem:[%s22 + $0x140] sm:$0xff]
      %v2222 = vld [vmem:[%s22 + $0x148] sm:$0xff]
      %v2223 = vld [vmem:[%s22 + $0x150] sm:$0xff]
      %v2224 = vld [vmem:[%s22 + $0x158] sm:$0xff]
      %v2225 = vld [vmem:[%s22 + $0x160] sm:$0xff]
      %v2226 = vld [vmem:[%s22 + $0x168] sm:$0xff]
      %v2227 = vld [vmem:[%s22 + $0x170] sm:$0xff]
      %v2228 = vld [vmem:[%s22 + $0x178] sm:$0xff]
      %v2229 = vld [vmem:[%s22 + $0x180] sm:$0xff]
      %v2230 = vld [vmem:[%s22 + $0x188] sm:$0xff]
      %v2231 = vld [vmem:[%s22 + $0x190] sm:$0xff]
      %v2232 = vld [vmem:[%s22 + $0x198] sm:$0xff]
      %v2233 = vld [vmem:[%s22 + $0x1a0] sm:$0xff]
      %v2234 = vld [vmem:[%s22 + $0x1a8] sm:$0xff]
      %v2235 = vld [vmem:[%s22 + $0x1b0] sm:$0xff]
      %v2236 = vld [vmem:[%s22 + $0x1b8] sm:$0xff]
      %v2237 = vld [vmem:[%s22 + $0x1c0] sm:$0xff]
      %v2238 = vld [vmem:[%s22 + $0x1c8] sm:$0xff]
      %v2239 = vld [vmem:[%s22 + $0x1d0] sm:$0xff]
      %v2240 = vld [vmem:[%s22 + $0x1d8] sm:$0xff]
      %v2241 = vld [vmem:[%s22 + $0x1e0] sm:$0xff]
      %v2242 = vld [vmem:[%s22 + $0x1e8] sm:$0xff]
      %v2243 = vld [vmem:[%s22 + $0x1f0] sm:$0xff]
      %v2244 = vld [vmem:[%s22 + $0x1f8] sm:$0xff]
      %v2246 = vsel %vm759, %v2179, 0
      %2248 = vmatpush.msra.mxu0 0.0
      %2249 = vmatpush.msra.mxu0 0.0
      %2250 = vmatpush.msra.mxu0 0.0
      %2251 = vmatpush.msra.mxu0 0.0
      %2252 = vmatpush.msra.mxu0 0.0
      %2253 = vmatpush.msra.mxu0 0.0
      %2254 = vmatpush.msra.mxu0 0.0
      %2255 = vmatpush.msra.mxu0 0.0
      %2256 = vmatpush.msra.mxu0 %v2237
      %2257 = vmatpush.msra.mxu0 %v2229
      %2258 = vmatpush.msra.mxu0 %v2221
      %2259 = vmatpush.msra.mxu0 %v2213
      %2260 = vmatpush.msra.mxu0 %v2205
      %2261 = vmatpush.msra.mxu0 %v2197
      %2262 = vmatpush.msra.mxu0 %v2189
      %2263 = vmatpush.msra.mxu0 %v2181
      %2264 = vmatmul.f32.gmra.mxu0 %v2246
      %v2265 = vpop.f32.mrf.mxu0
      %v2266 = vadd.f32 0.0, %v2265
      %2267 = vdwg.mxu0
      %2268 = vmatpush.msra.mxu0 0.0
      %2269 = vmatpush.msra.mxu0 0.0
      %2270 = vmatpush.msra.mxu0 0.0
      %2271 = vmatpush.msra.mxu0 0.0
      %2272 = vmatpush.msra.mxu0 0.0
      %2273 = vmatpush.msra.mxu0 0.0
      %2274 = vmatpush.msra.mxu0 0.0
      %2275 = vmatpush.msra.mxu0 0.0
      %2276 = vmatpush.msra.mxu0 %v2238
      %2277 = vmatpush.msra.mxu0 %v2230
      %2278 = vmatpush.msra.mxu0 %v2222
      %2279 = vmatpush.msra.mxu0 %v2214
      %2280 = vmatpush.msra.mxu0 %v2206
      %2281 = vmatpush.msra.mxu0 %v2198
      %2282 = vmatpush.msra.mxu0 %v2190
      %2283 = vmatpush.msra.mxu0 %v2182
      %2284 = vmatmul.f32.gmra.mxu0 %v2246
      %v2285 = vpop.f32.mrf.mxu0
      %v2286 = vadd.f32 0.0, %v2285
      %2287 = vdwg.mxu0
      %2288 = vmatpush.msra.mxu0 0.0
      %2289 = vmatpush.msra.mxu0 0.0
      %2290 = vmatpush.msra.mxu0 0.0
      %2291 = vmatpush.msra.mxu0 0.0
      %2292 = vmatpush.msra.mxu0 0.0
      %2293 = vmatpush.msra.mxu0 0.0
      %2294 = vmatpush.msra.mxu0 0.0
      %2295 = vmatpush.msra.mxu0 0.0
      %2296 = vmatpush.msra.mxu0 %v2239
      %2297 = vmatpush.msra.mxu0 %v2231
      %2298 = vmatpush.msra.mxu0 %v2223
      %2299 = vmatpush.msra.mxu0 %v2215
      %2300 = vmatpush.msra.mxu0 %v2207
      %2301 = vmatpush.msra.mxu0 %v2199
      %2302 = vmatpush.msra.mxu0 %v2191
      %2303 = vmatpush.msra.mxu0 %v2183
      %2304 = vmatmul.f32.gmra.mxu0 %v2246
      %v2305 = vpop.f32.mrf.mxu0
      %v2306 = vadd.f32 0.0, %v2305
      %2307 = vdwg.mxu0
      %2308 = vmatpush.msra.mxu0 0.0
      %2309 = vmatpush.msra.mxu0 0.0
      %2310 = vmatpush.msra.mxu0 0.0
      %2311 = vmatpush.msra.mxu0 0.0
      %2312 = vmatpush.msra.mxu0 0.0
      %2313 = vmatpush.msra.mxu0 0.0
      %2314 = vmatpush.msra.mxu0 0.0
      %2315 = vmatpush.msra.mxu0 0.0
      %2316 = vmatpush.msra.mxu0 %v2240
      %2317 = vmatpush.msra.mxu0 %v2232
      %2318 = vmatpush.msra.mxu0 %v2224
      %2319 = vmatpush.msra.mxu0 %v2216
      %2320 = vmatpush.msra.mxu0 %v2208
      %2321 = vmatpush.msra.mxu0 %v2200
      %2322 = vmatpush.msra.mxu0 %v2192
      %2323 = vmatpush.msra.mxu0 %v2184
      %2324 = vmatmul.f32.gmra.mxu0 %v2246
      %v2325 = vpop.f32.mrf.mxu0
      %v2326 = vadd.f32 0.0, %v2325
      %2327 = vdwg.mxu0
      %2328 = vmatpush.msra.mxu0 0.0
      %2329 = vmatpush.msra.mxu0 0.0
      %2330 = vmatpush.msra.mxu0 0.0
      %2331 = vmatpush.msra.mxu0 0.0
      %2332 = vmatpush.msra.mxu0 0.0
      %2333 = vmatpush.msra.mxu0 0.0
      %2334 = vmatpush.msra.mxu0 0.0
      %2335 = vmatpush.msra.mxu0 0.0
      %2336 = vmatpush.msra.mxu0 %v2241
      %2337 = vmatpush.msra.mxu0 %v2233
      %2338 = vmatpush.msra.mxu0 %v2225
      %2339 = vmatpush.msra.mxu0 %v2217
      %2340 = vmatpush.msra.mxu0 %v2209
      %2341 = vmatpush.msra.mxu0 %v2201
      %2342 = vmatpush.msra.mxu0 %v2193
      %2343 = vmatpush.msra.mxu0 %v2185
      %2344 = vmatmul.f32.gmra.mxu0 %v2246
      %v2345 = vpop.f32.mrf.mxu0
      %v2346 = vadd.f32 0.0, %v2345
      %2347 = vdwg.mxu0
      %2348 = vmatpush.msra.mxu0 0.0
      %2349 = vmatpush.msra.mxu0 0.0
      %2350 = vmatpush.msra.mxu0 0.0
      %2351 = vmatpush.msra.mxu0 0.0
      %2352 = vmatpush.msra.mxu0 0.0
      %2353 = vmatpush.msra.mxu0 0.0
      %2354 = vmatpush.msra.mxu0 0.0
      %2355 = vmatpush.msra.mxu0 0.0
      %2356 = vmatpush.msra.mxu0 %v2242
      %2357 = vmatpush.msra.mxu0 %v2234
      %2358 = vmatpush.msra.mxu0 %v2226
      %2359 = vmatpush.msra.mxu0 %v2218
      %2360 = vmatpush.msra.mxu0 %v2210
      %2361 = vmatpush.msra.mxu0 %v2202
      %2362 = vmatpush.msra.mxu0 %v2194
      %2363 = vmatpush.msra.mxu0 %v2186
      %2364 = vmatmul.f32.gmra.mxu0 %v2246
      %v2365 = vpop.f32.mrf.mxu0
      %v2366 = vadd.f32 0.0, %v2365
      %2367 = vdwg.mxu0
      %2368 = vmatpush.msra.mxu0 0.0
      %2369 = vmatpush.msra.mxu0 0.0
      %2370 = vmatpush.msra.mxu0 0.0
      %2371 = vmatpush.msra.mxu0 0.0
      %2372 = vmatpush.msra.mxu0 0.0
      %2373 = vmatpush.msra.mxu0 0.0
      %2374 = vmatpush.msra.mxu0 0.0
      %2375 = vmatpush.msra.mxu0 0.0
      %2376 = vmatpush.msra.mxu0 %v2243
      %2377 = vmatpush.msra.mxu0 %v2235
      %2378 = vmatpush.msra.mxu0 %v2227
      %2379 = vmatpush.msra.mxu0 %v2219
      %2380 = vmatpush.msra.mxu0 %v2211
      %2381 = vmatpush.msra.mxu0 %v2203
      %2382 = vmatpush.msra.mxu0 %v2195
      %2383 = vmatpush.msra.mxu0 %v2187
      %2384 = vmatmul.f32.gmra.mxu0 %v2246
      %v2385 = vpop.f32.mrf.mxu0
      %v2386 = vadd.f32 0.0, %v2385
      %2387 = vdwg.mxu0
      %2388 = vmatpush.msra.mxu0 0.0
      %2389 = vmatpush.msra.mxu0 0.0
      %2390 = vmatpush.msra.mxu0 0.0
      %2391 = vmatpush.msra.mxu0 0.0
      %2392 = vmatpush.msra.mxu0 0.0
      %2393 = vmatpush.msra.mxu0 0.0
      %2394 = vmatpush.msra.mxu0 0.0
      %2395 = vmatpush.msra.mxu0 0.0
      %2396 = vmatpush.msra.mxu0 %v2244
      %2397 = vmatpush.msra.mxu0 %v2236
      %2398 = vmatpush.msra.mxu0 %v2228
      %2399 = vmatpush.msra.mxu0 %v2220
      %2400 = vmatpush.msra.mxu0 %v2212
      %2401 = vmatpush.msra.mxu0 %v2204
      %2402 = vmatpush.msra.mxu0 %v2196
      %2403 = vmatpush.msra.mxu0 %v2188
      %2404 = vmatmul.f32.gmra.mxu0 %v2246
      %v2405 = vpop.f32.mrf.mxu0
      %v2406 = vadd.f32 0.0, %v2405
      %2407 = vdwg.mxu0
      %2408 = vst [vmem:[%s710] sm:$0x1f] %v2266
      %2409 = vst [vmem:[%s710 + $0x8] sm:$0x1f] %v2286
      %2410 = vst [vmem:[%s710 + $0x10] sm:$0x1f] %v2306
      %2411 = vst [vmem:[%s710 + $0x18] sm:$0x1f] %v2326
      %2412 = vst [vmem:[%s710 + $0x20] sm:$0x1f] %v2346
      %2413 = vst [vmem:[%s710 + $0x28] sm:$0x1f] %v2366
      %2414 = vst [vmem:[%s710 + $0x30] sm:$0x1f] %v2386
      %2415 = vst [vmem:[%s710 + $0x38] sm:$0x1f] %v2406
      %p2416 = scmp.lt.s32.totalorder %s34, 1
      %s2417 = scalar_select %p2416, %s34, 1
      %s2418 = smul.addr %s2417, 8
      %s2419 = smul.addr %s2418, 8
      %s2420 = scalar_lea.vmem %s23, %s2419
      // Predicated region
      $region113: #{_lambda_.1} parent=111 // pred_check
        %p2421 = pneg %p540
      $region114: #{_lambda_.1} parent=111 // pred_check_branch
        %2423 = sbr.rel (%p2421) target = $region116
      $region115: #{_lambda_.1} parent=111 // pred_region
        _
      $region116: #{_lambda_.1} parent=111 // pred_fallthru
        _
    $region112: #{_lambda_.1} parent=5 // pred_fallthru
      _
    %p2424 = scmp.le.s32.totalorder 2, %s29
    // Predicated region
    $region117: #{_lambda_.1} parent=5 // pred_check
      %p2425 = pneg %p2424
    $region118: #{_lambda_.1} parent=5 // pred_check_branch
      %2427 = sbr.rel (%p2425) target = $region120
    $region119: #{_lambda_.1} parent=5 // pred_region
      %s2428 = ssub.s32 %s29, 2
      // Predicated region
      $region121: #{_lambda_.1} parent=119 // pred_check
        %p2429 = pneg %p546
      $region122: #{_lambda_.1} parent=119 // pred_check_branch
        %2431 = sbr.rel (%p2429) target = $region124
      $region123: #{_lambda_.1} parent=119 // pred_region
        %p2432 = scmp.lt.s32.totalorder %s35, 1
        %s2433 = scalar_select %p2432, %s35, 1
        %s2434 = smul.addr %s2433, 8
        %s2435 = smul.addr %s2434, 8
        %s2436 = scalar_lea.vmem %s23, %s2435
      $region124: #{_lambda_.1} parent=119 // pred_fallthru
        _
    $region120: #{_lambda_.1} parent=5 // pred_fallthru
      _
  $region6: #{_lambda_.1} parent=0 // loop_footer
    %s33 = sadd.s32 1, %s29
  $region7: #{_lambda_.1} parent=0 // loop_footer_branch
    %28 = sbr.rel target = $region3
  $region8: #{_lambda_.1} parent=0 // loop_exit
    _

</llo_original>
